<compile_context>
chip_gen: v5e
topology: v5e:2x2
jax: 0.10.0
libtpu: 0.0.40
codegen_flags: <defaults>
</compile_context>

<pallas_src>
import jax
import jax.numpy as jnp
from jax.experimental import pallas as pl
from jax.experimental.pallas import tpu as pltpu


# ----------------------------- Pallas kernel ---------------------------------
def cnn_conv1d_kernel(x_ref, w1_ref, b1_ref, w2_ref, b2_ref, w3_ref, b3_ref,
                      wl1_ref, bl1_ref, wl2_ref, bl2_ref, sel_ref, out_ref):
    """One grid step processes a tile of TB batch elements.

    x_ref   : (TB*L0, C0) bf16    channels-last, batch folded into rows (stride L0)
    w*_ref  : (3, C_in, C_out) bf16   per-tap conv weights
    b*_ref  : (1, C_out) f32
    wl1_ref : (L3, C3, 128) bf16  linear1 weight, wl1[t, c, o] = Wl1_torch[o, c*L3 + t]
    bl1_ref : (1, 128) f32
    wl2_ref : (128, OUT_PAD) bf16 zero-padded to a full 128-lane output
    bl2_ref : (1, OUT_PAD) f32
    sel_ref : (TB, span) bf16     0/1 row-selection matrix, span = (TB-1)*L0 + 1
    out_ref : (TB, OUT_PAD) f32
    """
    TB = out_ref.shape[0]
    L0 = x_ref.shape[0] // TB
    L3 = wl1_ref.shape[0]               # valid length after three k=3 convs (== 14)
    span = sel_ref.shape[1]             # (TB - 1) * L0 + 1

    def conv_relu(h_in, w_ref, b_ref):
        # Three tap matmuls accumulated in f32 (no im2col lane concat).
        m = h_in.shape[0] - 2
        acc = jnp.dot(h_in[0:m], w_ref[0], preferred_element_type=jnp.float32)
        acc = acc + jnp.dot(h_in[1:m + 1], w_ref[1], preferred_element_type=jnp.float32)
        acc = acc + jnp.dot(h_in[2:m + 2], w_ref[2], preferred_element_type=jnp.float32)
        return jnp.maximum(acc + b_ref[...], 0.0).astype(jnp.bfloat16)

    # Rows past the valid length inside each element's L0-stride block are cross-element
    # "garbage", but they are finite and never read when producing valid positions of
    # the next layer (valid row t of layer j needs rows t..t+2 < previous valid length,
    # guaranteed by the wrapper's static L0 == L3 + 6 check), so no masking is needed.
    h = x_ref[...]                       # (TB*L0, C0) bf16
    h = conv_relu(h, w1_ref, b1_ref)     # (TB*L0-2, C1)
    h = conv_relu(h, w2_ref, b2_ref)     # (TB*L0-4, C2)
    h = conv_relu(h, w3_ref, b3_ref)     # (TB*L0-6, C3)

    # linear1 over the folded row axis: y_full[i] = sum_t h[i+t] @ wl1[t]; only rows
    # i = b*L0 are the per-element flatten results, selected below.  14 small K=C3
    # MXU matmuls + f32 adds replace the old 224-lane concat.
    acc = jnp.dot(h[0:span], wl1_ref[0], preferred_element_type=jnp.float32)
    for t in range(1, L3):
        acc = acc + jnp.dot(h[t:t + span], wl1_ref[t],
                            preferred_element_type=jnp.float32)
    y_full = jnp.maximum(acc + bl1_ref[...], 0.0).astype(jnp.bfloat16)   # (span, 128)

    # Single 0/1 selection matmul picks row b*L0 for every batch element (exact pick:
    # coefficients are 0/1, accumulation in f32).  Replaces the O(TB) per-row gather.
    y = jnp.dot(sel_ref[...], y_full,
                preferred_element_type=jnp.float32).astype(jnp.bfloat16)  # (TB, 128)

    # linear2 (output padded to 128 lanes -> lane-dense store).
    out_ref[...] = (jnp.dot(y, wl2_ref[...], preferred_element_type=jnp.float32)
                    + bl2_ref[...])


# ------------------------------- wrapper --------------------------------------
def cnn_conv1d_forward(x, params, output_size, *, batch_tile=None):
    """x: (B, L0, C0) float32 — same layout as the torch module's input (B, seq, feat)."""
    (w1, b1, w2, b2, w3, b3, wl1, bl1, wl2, bl2) = params
    B, L0, C0 = x.shape
    L3 = wl1.shape[0]
    out_pad = wl2.shape[1]
    # Static guarantee that the "garbage rows are never read" argument holds.
    assert L0 == L3 + 6, "sequence length must be linear1's expected conv length + 6"

    # Tile policy: whole batch in one step when small; otherwise <=64 elements per tile
    # so v7x (2 TCs, 64 MiB VMEM) gets >=2 parallel grid steps and v6e/v5e overlap the
    # input DMA of tile i+1 with compute of tile i.
    if batch_tile is None:
        TB = B if B <= 64 else 64
    else:
        TB = min(batch_tile, B)
    n_tiles = -(-B // TB)
    if n_tiles > 1 and TB % 8 != 0:
        # Partial blocks must satisfy the (8, 128) tiling constraint.
        TB = -(-TB // 8) * 8
        n_tiles = -(-B // TB)
    b_pad = n_tiles * TB
    if b_pad != B:
        x = jnp.concatenate([x, jnp.zeros((b_pad - B, L0, C0), x.dtype)], axis=0)

    # Fold batch into the row axis (stride L0 per element) and pre-cast to bf16.
    x2 = x.reshape(b_pad * L0, C0).astype(jnp.bfloat16)

    # 0/1 selection matrix: picks row b*L0 of the (span, 128) linear1 result.
    span = (TB - 1) * L0 + 1
    sel = jnp.zeros((TB, span), jnp.bfloat16)
    sel = sel.at[jnp.arange(TB), jnp.arange(TB) * L0].set(1)

    def full(a):
        return pl.BlockSpec(a.shape, lambda i: (0,) * a.ndim)

    out = pl.pallas_call(
        cnn_conv1d_kernel,
        out_shape=jax.ShapeDtypeStruct((b_pad, out_pad), jnp.float32),
        grid=(n_tiles,),
        in_specs=[
            pl.BlockSpec((TB * L0, C0), lambda i: (i, 0)),
            full(w1), full(b1), full(w2), full(b2), full(w3), full(b3),
            full(wl1), full(bl1), full(wl2), full(bl2), full(sel),
        ],
        out_specs=pl.BlockSpec((TB, out_pad), lambda i: (i, 0)),
        compiler_params=pltpu.CompilerParams(
            dimension_semantics=("parallel",),
            vmem_limit_bytes=32 * 1024 * 1024,   # explicit (v5e defaults to 16 MiB)
        ),
    )(x2, w1, b1, w2, b2, w3, b3, wl1, bl1, wl2, bl2, sel)
    return out[:B, :output_size]


# ------------------------- parameter construction ----------------------------
def init_torch_params(key, feature_size, out_channels, output_size):
    """Deterministic params in *torch* conventions (Conv1d: (Cout,Cin,K), Linear: (out,in))."""
    def unif(key, shape, fan_in):
        bound = 1.0 / jnp.sqrt(float(fan_in))
        return jax.random.uniform(key, shape, jnp.float32, -bound, bound)

    ks = jax.random.split(key, 10)
    c0, (c1, c2, c3) = feature_size, out_channels
    W1c = unif(ks[0], (c1, c0, 3), c0 * 3); B1c = unif(ks[1], (c1,), c0 * 3)
    W2c = unif(ks[2], (c2, c1, 3), c1 * 3); B2c = unif(ks[3], (c2,), c1 * 3)
    W3c = unif(ks[4], (c3, c2, 3), c2 * 3); B3c = unif(ks[5], (c3,), c2 * 3)
    Wl1 = unif(ks[6], (128, c3 * 14), c3 * 14); Bl1 = unif(ks[7], (128,), c3 * 14)
    Wl2 = unif(ks[8], (output_size, 128), 128); Bl2 = unif(ks[9], (output_size,), 128)
    return (W1c, B1c, W2c, B2c, W3c, B3c, Wl1, Bl1, Wl2, Bl2)


def torch_to_kernel_params(tp):
    """Convert torch-convention params to the kernel layout (per-tap + bf16 + padded out)."""
    (W1c, B1c, W2c, B2c, W3c, B3c, Wl1, Bl1, Wl2, Bl2) = tp

    def conv_taps(W):  # (Cout, Cin, K) -> (K, Cin, Cout)
        return jnp.transpose(W, (2, 1, 0)).astype(jnp.bfloat16)

    c3 = W3c.shape[0]
    n_hidden, flat_in = Wl1.shape
    l3 = flat_in // c3
    # torch flatten index = c*L3 + t ; kernel wants wl1[t, c, o] = Wl1[o, c*L3 + t]
    wl1 = jnp.transpose(Wl1.reshape(n_hidden, c3, l3), (2, 1, 0)).astype(jnp.bfloat16)

    out_size = Wl2.shape[0]
    out_pad = -(-out_size // 128) * 128                 # lane-dense output store
    wl2 = jnp.zeros((Wl2.shape[1], out_pad), jnp.bfloat16)
    wl2 = wl2.at[:, :out_size].set(Wl2.T.astype(jnp.bfloat16))
    bl2 = jnp.zeros((1, out_pad), jnp.float32).at[0, :out_size].set(Bl2)

    fb = lambda b: b.reshape(1, -1).astype(jnp.float32)
    return (conv_taps(W1c), fb(B1c), conv_taps(W2c), fb(B2c),
            conv_taps(W3c), fb(B3c), wl1, fb(Bl1), wl2, bl2)


# ----------------------------- pure-JAX reference ----------------------------
def reference_forward(x, tp):
    """Mirrors the PyTorch module exactly (NCL conv, channel-major flatten), in f32."""
    (W1c, B1c, W2c, B2c, W3c, B3c, Wl1, Bl1, Wl2, Bl2) = tp

    def conv1d(h, W, b):  # h: (B, Cin, L), W: (Cout, Cin, 3)
        L_out = h.shape[2] - 2
        y = b[None, :, None]
        for k in range(3):
            y = y + jnp.einsum('bcl,oc->bol', h[:, :, k:k + L_out], W[:, :, k])
        return y

    h = jnp.transpose(x, (0, 2, 1))                 # (B, C0, L0)
    h = jax.nn.relu(conv1d(h, W1c, B1c))
    h = jax.nn.relu(conv1d(h, W2c, B2c))
    h = jax.nn.relu(conv1d(h, W3c, B3c))            # (B, C3, 14)
    h = h.reshape(h.shape[0], -1)                   # channel-major flatten
    h = jax.nn.relu(h @ Wl1.T + Bl1)
    return h @ Wl2.T + Bl2


# ------------------------------------ main ------------------------------------
if __name__ == "__main__":
    feature_size = 8
    out_channels = (16, 16, 16)
    output_size = 10
    B, L0 = 2, 20  # L0 = 20 so that after three k=3 convs the length is 14 (linear1 expects C3*14)

    key = jax.random.PRNGKey(0)
    kx, kp = jax.random.split(key)
    x = jax.random.normal(kx, (B, L0, feature_size), jnp.float32)

    torch_params = init_torch_params(kp, feature_size, out_channels, output_size)
    kernel_params = torch_to_kernel_params(torch_params)

    out = cnn_conv1d_forward(x, kernel_params, output_size)
    out = jax.block_until_ready(out)

    ref = reference_forward(x, torch_params)
    assert out.shape == (B, output_size)
    # Kernel feeds the MXU bf16 operands (f32 accumulation); compare to the f32 reference
    # with a bf16-level tolerance.
    assert jnp.allclose(out, ref, rtol=2e-2, atol=2e-2), (out, ref)

    print("KERNEL_OK")
</pallas_src>

<mosaic_0001>
module attributes {stable_mosaic.version = 11 : i64} {
  func.func @cnn_conv1d_kernel(%arg0: i32, %arg1: memref<40x8xbf16, #tpu.memory_space<vmem>>, %arg2: memref<3x8x16xbf16, #tpu.memory_space<vmem>>, %arg3: memref<1x16xf32, #tpu.memory_space<vmem>>, %arg4: memref<3x16x16xbf16, #tpu.memory_space<vmem>>, %arg5: memref<1x16xf32, #tpu.memory_space<vmem>>, %arg6: memref<3x16x16xbf16, #tpu.memory_space<vmem>>, %arg7: memref<1x16xf32, #tpu.memory_space<vmem>>, %arg8: memref<14x16x128xbf16, #tpu.memory_space<vmem>>, %arg9: memref<1x128xf32, #tpu.memory_space<vmem>>, %arg10: memref<128x128xbf16, #tpu.memory_space<vmem>>, %arg11: memref<1x128xf32, #tpu.memory_space<vmem>>, %arg12: memref<2x21xbf16, #tpu.memory_space<vmem>>, %arg13: memref<2x128xf32, #tpu.memory_space<vmem>>) attributes {dimension_semantics = [#tpu.dimension_semantics<parallel>], iteration_bounds = array<i64: 1>, scalar_prefetch = 0 : i64, scratch_operands = 0 : i64, tpu.core_type = #tpu.core_type<tc>, window_params = [{transform_indices = @transform_0, window_bounds = array<i64: 40, 8>}, {pipeline_mode = #tpu.pipeline_mode<synchronous>, transform_indices = @transform_1, window_bounds = array<i64: 3, 8, 16>}, {pipeline_mode = #tpu.pipeline_mode<synchronous>, transform_indices = @transform_2, window_bounds = array<i64: 1, 16>}, {pipeline_mode = #tpu.pipeline_mode<synchronous>, transform_indices = @transform_3, window_bounds = array<i64: 3, 16, 16>}, {pipeline_mode = #tpu.pipeline_mode<synchronous>, transform_indices = @transform_4, window_bounds = array<i64: 1, 16>}, {pipeline_mode = #tpu.pipeline_mode<synchronous>, transform_indices = @transform_5, window_bounds = array<i64: 3, 16, 16>}, {pipeline_mode = #tpu.pipeline_mode<synchronous>, transform_indices = @transform_6, window_bounds = array<i64: 1, 16>}, {pipeline_mode = #tpu.pipeline_mode<synchronous>, transform_indices = @transform_7, window_bounds = array<i64: 14, 16, 128>}, {pipeline_mode = #tpu.pipeline_mode<synchronous>, transform_indices = @transform_8, window_bounds = array<i64: 1, 128>}, {pipeline_mode = #tpu.pipeline_mode<synchronous>, transform_indices = @transform_9, window_bounds = array<i64: 128, 128>}, {pipeline_mode = #tpu.pipeline_mode<synchronous>, transform_indices = @transform_10, window_bounds = array<i64: 1, 128>}, {pipeline_mode = #tpu.pipeline_mode<synchronous>, transform_indices = @transform_11, window_bounds = array<i64: 2, 21>}, {transform_indices = @transform_12, window_bounds = array<i64: 2, 128>}]} {
    %c0 = arith.constant 0 : index
    %c0_0 = arith.constant 0 : index
    %0 = vector.load %arg1[%c0, %c0_0] : memref<40x8xbf16, #tpu.memory_space<vmem>>, vector<40x8xbf16>
    %1 = vector.extract_strided_slice %0 {offsets = [0, 0], sizes = [38, 8], strides = [1, 1]} : vector<40x8xbf16> to vector<38x8xbf16>
    %c0_1 = arith.constant 0 : index
    %c0_2 = arith.constant 0 : index
    %c0_3 = arith.constant 0 : index
    %2 = vector.load %arg2[%c0_1, %c0_2, %c0_3] : memref<3x8x16xbf16, #tpu.memory_space<vmem>>, vector<1x8x16xbf16>
    %3 = vector.shape_cast %2 : vector<1x8x16xbf16> to vector<8x16xbf16>
    %cst = arith.constant dense<0.000000e+00> : vector<38x16xf32>
    %4 = tpu.matmul %1, %3, %cst {dimension_numbers = #tpu.dot_dimension_numbers<[1], [0], [0], [1], [0, 0, 1, 1], [], []>} : vector<38x8xbf16>, vector<8x16xbf16>, vector<38x16xf32> -> vector<38x16xf32>
    %5 = vector.extract_strided_slice %0 {offsets = [1, 0], sizes = [38, 8], strides = [1, 1]} : vector<40x8xbf16> to vector<38x8xbf16>
    %c1 = arith.constant 1 : index
    %c0_4 = arith.constant 0 : index
    %c0_5 = arith.constant 0 : index
    %6 = vector.load %arg2[%c1, %c0_4, %c0_5] : memref<3x8x16xbf16, #tpu.memory_space<vmem>>, vector<1x8x16xbf16>
    %7 = vector.shape_cast %6 : vector<1x8x16xbf16> to vector<8x16xbf16>
    %cst_6 = arith.constant dense<0.000000e+00> : vector<38x16xf32>
    %8 = tpu.matmul %5, %7, %cst_6 {dimension_numbers = #tpu.dot_dimension_numbers<[1], [0], [0], [1], [0, 0, 1, 1], [], []>} : vector<38x8xbf16>, vector<8x16xbf16>, vector<38x16xf32> -> vector<38x16xf32>
    %9 = arith.addf %4, %8 : vector<38x16xf32>
    %10 = vector.extract_strided_slice %0 {offsets = [2, 0], sizes = [38, 8], strides = [1, 1]} : vector<40x8xbf16> to vector<38x8xbf16>
    %c2 = arith.constant 2 : index
    %c0_7 = arith.constant 0 : index
    %c0_8 = arith.constant 0 : index
    %11 = vector.load %arg2[%c2, %c0_7, %c0_8] : memref<3x8x16xbf16, #tpu.memory_space<vmem>>, vector<1x8x16xbf16>
    %12 = vector.shape_cast %11 : vector<1x8x16xbf16> to vector<8x16xbf16>
    %cst_9 = arith.constant dense<0.000000e+00> : vector<38x16xf32>
    %13 = tpu.matmul %10, %12, %cst_9 {dimension_numbers = #tpu.dot_dimension_numbers<[1], [0], [0], [1], [0, 0, 1, 1], [], []>} : vector<38x8xbf16>, vector<8x16xbf16>, vector<38x16xf32> -> vector<38x16xf32>
    %14 = arith.addf %9, %13 : vector<38x16xf32>
    %c0_10 = arith.constant 0 : index
    %c0_11 = arith.constant 0 : index
    %15 = vector.load %arg3[%c0_10, %c0_11] : memref<1x16xf32, #tpu.memory_space<vmem>>, vector<1x16xf32>
    %16 = vector.broadcast %15 : vector<1x16xf32> to vector<38x16xf32>
    %17 = arith.addf %14, %16 : vector<38x16xf32>
    %cst_12 = arith.constant 0.000000e+00 : f32
    %18 = vector.broadcast %cst_12 : f32 to vector<38x16xf32>
    %19 = arith.maximumf %17, %18 : vector<38x16xf32>
    %20 = arith.truncf %19 : vector<38x16xf32> to vector<38x16xbf16>
    %21 = vector.extract_strided_slice %20 {offsets = [0, 0], sizes = [36, 16], strides = [1, 1]} : vector<38x16xbf16> to vector<36x16xbf16>
    %c0_13 = arith.constant 0 : index
    %c0_14 = arith.constant 0 : index
    %c0_15 = arith.constant 0 : index
    %22 = vector.load %arg4[%c0_13, %c0_14, %c0_15] : memref<3x16x16xbf16, #tpu.memory_space<vmem>>, vector<1x16x16xbf16>
    %23 = vector.shape_cast %22 : vector<1x16x16xbf16> to vector<16x16xbf16>
    %cst_16 = arith.constant dense<0.000000e+00> : vector<36x16xf32>
    %24 = tpu.matmul %21, %23, %cst_16 {dimension_numbers = #tpu.dot_dimension_numbers<[1], [0], [0], [1], [0, 0, 1, 1], [], []>} : vector<36x16xbf16>, vector<16x16xbf16>, vector<36x16xf32> -> vector<36x16xf32>
    %25 = vector.extract_strided_slice %20 {offsets = [1, 0], sizes = [36, 16], strides = [1, 1]} : vector<38x16xbf16> to vector<36x16xbf16>
    %c1_17 = arith.constant 1 : index
    %c0_18 = arith.constant 0 : index
    %c0_19 = arith.constant 0 : index
    %26 = vector.load %arg4[%c1_17, %c0_18, %c0_19] : memref<3x16x16xbf16, #tpu.memory_space<vmem>>, vector<1x16x16xbf16>
    %27 = vector.shape_cast %26 : vector<1x16x16xbf16> to vector<16x16xbf16>
    %cst_20 = arith.constant dense<0.000000e+00> : vector<36x16xf32>
    %28 = tpu.matmul %25, %27, %cst_20 {dimension_numbers = #tpu.dot_dimension_numbers<[1], [0], [0], [1], [0, 0, 1, 1], [], []>} : vector<36x16xbf16>, vector<16x16xbf16>, vector<36x16xf32> -> vector<36x16xf32>
    %29 = arith.addf %24, %28 : vector<36x16xf32>
    %30 = vector.extract_strided_slice %20 {offsets = [2, 0], sizes = [36, 16], strides = [1, 1]} : vector<38x16xbf16> to vector<36x16xbf16>
    %c2_21 = arith.constant 2 : index
    %c0_22 = arith.constant 0 : index
    %c0_23 = arith.constant 0 : index
    %31 = vector.load %arg4[%c2_21, %c0_22, %c0_23] : memref<3x16x16xbf16, #tpu.memory_space<vmem>>, vector<1x16x16xbf16>
    %32 = vector.shape_cast %31 : vector<1x16x16xbf16> to vector<16x16xbf16>
    %cst_24 = arith.constant dense<0.000000e+00> : vector<36x16xf32>
    %33 = tpu.matmul %30, %32, %cst_24 {dimension_numbers = #tpu.dot_dimension_numbers<[1], [0], [0], [1], [0, 0, 1, 1], [], []>} : vector<36x16xbf16>, vector<16x16xbf16>, vector<36x16xf32> -> vector<36x16xf32>
    %34 = arith.addf %29, %33 : vector<36x16xf32>
    %c0_25 = arith.constant 0 : index
    %c0_26 = arith.constant 0 : index
    %35 = vector.load %arg5[%c0_25, %c0_26] : memref<1x16xf32, #tpu.memory_space<vmem>>, vector<1x16xf32>
    %36 = vector.broadcast %35 : vector<1x16xf32> to vector<36x16xf32>
    %37 = arith.addf %34, %36 : vector<36x16xf32>
    %cst_27 = arith.constant 0.000000e+00 : f32
    %38 = vector.broadcast %cst_27 : f32 to vector<36x16xf32>
    %39 = arith.maximumf %37, %38 : vector<36x16xf32>
    %40 = arith.truncf %39 : vector<36x16xf32> to vector<36x16xbf16>
    %41 = vector.extract_strided_slice %40 {offsets = [0, 0], sizes = [34, 16], strides = [1, 1]} : vector<36x16xbf16> to vector<34x16xbf16>
    %c0_28 = arith.constant 0 : index
    %c0_29 = arith.constant 0 : index
    %c0_30 = arith.constant 0 : index
    %42 = vector.load %arg6[%c0_28, %c0_29, %c0_30] : memref<3x16x16xbf16, #tpu.memory_space<vmem>>, vector<1x16x16xbf16>
    %43 = vector.shape_cast %42 : vector<1x16x16xbf16> to vector<16x16xbf16>
    %cst_31 = arith.constant dense<0.000000e+00> : vector<34x16xf32>
    %44 = tpu.matmul %41, %43, %cst_31 {dimension_numbers = #tpu.dot_dimension_numbers<[1], [0], [0], [1], [0, 0, 1, 1], [], []>} : vector<34x16xbf16>, vector<16x16xbf16>, vector<34x16xf32> -> vector<34x16xf32>
    %45 = vector.extract_strided_slice %40 {offsets = [1, 0], sizes = [34, 16], strides = [1, 1]} : vector<36x16xbf16> to vector<34x16xbf16>
    %c1_32 = arith.constant 1 : index
    %c0_33 = arith.constant 0 : index
    %c0_34 = arith.constant 0 : index
    %46 = vector.load %arg6[%c1_32, %c0_33, %c0_34] : memref<3x16x16xbf16, #tpu.memory_space<vmem>>, vector<1x16x16xbf16>
    %47 = vector.shape_cast %46 : vector<1x16x16xbf16> to vector<16x16xbf16>
    %cst_35 = arith.constant dense<0.000000e+00> : vector<34x16xf32>
    %48 = tpu.matmul %45, %47, %cst_35 {dimension_numbers = #tpu.dot_dimension_numbers<[1], [0], [0], [1], [0, 0, 1, 1], [], []>} : vector<34x16xbf16>, vector<16x16xbf16>, vector<34x16xf32> -> vector<34x16xf32>
    %49 = arith.addf %44, %48 : vector<34x16xf32>
    %50 = vector.extract_strided_slice %40 {offsets = [2, 0], sizes = [34, 16], strides = [1, 1]} : vector<36x16xbf16> to vector<34x16xbf16>
    %c2_36 = arith.constant 2 : index
    %c0_37 = arith.constant 0 : index
    %c0_38 = arith.constant 0 : index
    %51 = vector.load %arg6[%c2_36, %c0_37, %c0_38] : memref<3x16x16xbf16, #tpu.memory_space<vmem>>, vector<1x16x16xbf16>
    %52 = vector.shape_cast %51 : vector<1x16x16xbf16> to vector<16x16xbf16>
    %cst_39 = arith.constant dense<0.000000e+00> : vector<34x16xf32>
    %53 = tpu.matmul %50, %52, %cst_39 {dimension_numbers = #tpu.dot_dimension_numbers<[1], [0], [0], [1], [0, 0, 1, 1], [], []>} : vector<34x16xbf16>, vector<16x16xbf16>, vector<34x16xf32> -> vector<34x16xf32>
    %54 = arith.addf %49, %53 : vector<34x16xf32>
    %c0_40 = arith.constant 0 : index
    %c0_41 = arith.constant 0 : index
    %55 = vector.load %arg7[%c0_40, %c0_41] : memref<1x16xf32, #tpu.memory_space<vmem>>, vector<1x16xf32>
    %56 = vector.broadcast %55 : vector<1x16xf32> to vector<34x16xf32>
    %57 = arith.addf %54, %56 : vector<34x16xf32>
    %cst_42 = arith.constant 0.000000e+00 : f32
    %58 = vector.broadcast %cst_42 : f32 to vector<34x16xf32>
    %59 = arith.maximumf %57, %58 : vector<34x16xf32>
    %60 = arith.truncf %59 : vector<34x16xf32> to vector<34x16xbf16>
    %61 = vector.extract_strided_slice %60 {offsets = [0, 0], sizes = [21, 16], strides = [1, 1]} : vector<34x16xbf16> to vector<21x16xbf16>
    %c0_43 = arith.constant 0 : index
    %c0_44 = arith.constant 0 : index
    %c0_45 = arith.constant 0 : index
    %62 = vector.load %arg8[%c0_43, %c0_44, %c0_45] : memref<14x16x128xbf16, #tpu.memory_space<vmem>>, vector<1x16x128xbf16>
    %63 = vector.shape_cast %62 : vector<1x16x128xbf16> to vector<16x128xbf16>
    %cst_46 = arith.constant dense<0.000000e+00> : vector<21x128xf32>
    %64 = tpu.matmul %61, %63, %cst_46 {dimension_numbers = #tpu.dot_dimension_numbers<[1], [0], [0], [1], [0, 0, 1, 1], [], []>} : vector<21x16xbf16>, vector<16x128xbf16>, vector<21x128xf32> -> vector<21x128xf32>
    %65 = vector.extract_strided_slice %60 {offsets = [1, 0], sizes = [21, 16], strides = [1, 1]} : vector<34x16xbf16> to vector<21x16xbf16>
    %c1_47 = arith.constant 1 : index
    %c0_48 = arith.constant 0 : index
    %c0_49 = arith.constant 0 : index
    %66 = vector.load %arg8[%c1_47, %c0_48, %c0_49] : memref<14x16x128xbf16, #tpu.memory_space<vmem>>, vector<1x16x128xbf16>
    %67 = vector.shape_cast %66 : vector<1x16x128xbf16> to vector<16x128xbf16>
    %cst_50 = arith.constant dense<0.000000e+00> : vector<21x128xf32>
    %68 = tpu.matmul %65, %67, %cst_50 {dimension_numbers = #tpu.dot_dimension_numbers<[1], [0], [0], [1], [0, 0, 1, 1], [], []>} : vector<21x16xbf16>, vector<16x128xbf16>, vector<21x128xf32> -> vector<21x128xf32>
    %69 = arith.addf %64, %68 : vector<21x128xf32>
    %70 = vector.extract_strided_slice %60 {offsets = [2, 0], sizes = [21, 16], strides = [1, 1]} : vector<34x16xbf16> to vector<21x16xbf16>
    %c2_51 = arith.constant 2 : index
    %c0_52 = arith.constant 0 : index
    %c0_53 = arith.constant 0 : index
    %71 = vector.load %arg8[%c2_51, %c0_52, %c0_53] : memref<14x16x128xbf16, #tpu.memory_space<vmem>>, vector<1x16x128xbf16>
    %72 = vector.shape_cast %71 : vector<1x16x128xbf16> to vector<16x128xbf16>
    %cst_54 = arith.constant dense<0.000000e+00> : vector<21x128xf32>
    %73 = tpu.matmul %70, %72, %cst_54 {dimension_numbers = #tpu.dot_dimension_numbers<[1], [0], [0], [1], [0, 0, 1, 1], [], []>} : vector<21x16xbf16>, vector<16x128xbf16>, vector<21x128xf32> -> vector<21x128xf32>
    %74 = arith.addf %69, %73 : vector<21x128xf32>
    %75 = vector.extract_strided_slice %60 {offsets = [3, 0], sizes = [21, 16], strides = [1, 1]} : vector<34x16xbf16> to vector<21x16xbf16>
    %c3 = arith.constant 3 : index
    %c0_55 = arith.constant 0 : index
    %c0_56 = arith.constant 0 : index
    %76 = vector.load %arg8[%c3, %c0_55, %c0_56] : memref<14x16x128xbf16, #tpu.memory_space<vmem>>, vector<1x16x128xbf16>
    %77 = vector.shape_cast %76 : vector<1x16x128xbf16> to vector<16x128xbf16>
    %cst_57 = arith.constant dense<0.000000e+00> : vector<21x128xf32>
    %78 = tpu.matmul %75, %77, %cst_57 {dimension_numbers = #tpu.dot_dimension_numbers<[1], [0], [0], [1], [0, 0, 1, 1], [], []>} : vector<21x16xbf16>, vector<16x128xbf16>, vector<21x128xf32> -> vector<21x128xf32>
    %79 = arith.addf %74, %78 : vector<21x128xf32>
    %80 = vector.extract_strided_slice %60 {offsets = [4, 0], sizes = [21, 16], strides = [1, 1]} : vector<34x16xbf16> to vector<21x16xbf16>
    %c4 = arith.constant 4 : index
    %c0_58 = arith.constant 0 : index
    %c0_59 = arith.constant 0 : index
    %81 = vector.load %arg8[%c4, %c0_58, %c0_59] : memref<14x16x128xbf16, #tpu.memory_space<vmem>>, vector<1x16x128xbf16>
    %82 = vector.shape_cast %81 : vector<1x16x128xbf16> to vector<16x128xbf16>
    %cst_60 = arith.constant dense<0.000000e+00> : vector<21x128xf32>
    %83 = tpu.matmul %80, %82, %cst_60 {dimension_numbers = #tpu.dot_dimension_numbers<[1], [0], [0], [1], [0, 0, 1, 1], [], []>} : vector<21x16xbf16>, vector<16x128xbf16>, vector<21x128xf32> -> vector<21x128xf32>
    %84 = arith.addf %79, %83 : vector<21x128xf32>
    %85 = vector.extract_strided_slice %60 {offsets = [5, 0], sizes = [21, 16], strides = [1, 1]} : vector<34x16xbf16> to vector<21x16xbf16>
    %c5 = arith.constant 5 : index
    %c0_61 = arith.constant 0 : index
    %c0_62 = arith.constant 0 : index
    %86 = vector.load %arg8[%c5, %c0_61, %c0_62] : memref<14x16x128xbf16, #tpu.memory_space<vmem>>, vector<1x16x128xbf16>
    %87 = vector.shape_cast %86 : vector<1x16x128xbf16> to vector<16x128xbf16>
    %cst_63 = arith.constant dense<0.000000e+00> : vector<21x128xf32>
    %88 = tpu.matmul %85, %87, %cst_63 {dimension_numbers = #tpu.dot_dimension_numbers<[1], [0], [0], [1], [0, 0, 1, 1], [], []>} : vector<21x16xbf16>, vector<16x128xbf16>, vector<21x128xf32> -> vector<21x128xf32>
    %89 = arith.addf %84, %88 : vector<21x128xf32>
    %90 = vector.extract_strided_slice %60 {offsets = [6, 0], sizes = [21, 16], strides = [1, 1]} : vector<34x16xbf16> to vector<21x16xbf16>
    %c6 = arith.constant 6 : index
    %c0_64 = arith.constant 0 : index
    %c0_65 = arith.constant 0 : index
    %91 = vector.load %arg8[%c6, %c0_64, %c0_65] : memref<14x16x128xbf16, #tpu.memory_space<vmem>>, vector<1x16x128xbf16>
    %92 = vector.shape_cast %91 : vector<1x16x128xbf16> to vector<16x128xbf16>
    %cst_66 = arith.constant dense<0.000000e+00> : vector<21x128xf32>
    %93 = tpu.matmul %90, %92, %cst_66 {dimension_numbers = #tpu.dot_dimension_numbers<[1], [0], [0], [1], [0, 0, 1, 1], [], []>} : vector<21x16xbf16>, vector<16x128xbf16>, vector<21x128xf32> -> vector<21x128xf32>
    %94 = arith.addf %89, %93 : vector<21x128xf32>
    %95 = vector.extract_strided_slice %60 {offsets = [7, 0], sizes = [21, 16], strides = [1, 1]} : vector<34x16xbf16> to vector<21x16xbf16>
    %c7 = arith.constant 7 : index
    %c0_67 = arith.constant 0 : index
    %c0_68 = arith.constant 0 : index
    %96 = vector.load %arg8[%c7, %c0_67, %c0_68] : memref<14x16x128xbf16, #tpu.memory_space<vmem>>, vector<1x16x128xbf16>
    %97 = vector.shape_cast %96 : vector<1x16x128xbf16> to vector<16x128xbf16>
    %cst_69 = arith.constant dense<0.000000e+00> : vector<21x128xf32>
    %98 = tpu.matmul %95, %97, %cst_69 {dimension_numbers = #tpu.dot_dimension_numbers<[1], [0], [0], [1], [0, 0, 1, 1], [], []>} : vector<21x16xbf16>, vector<16x128xbf16>, vector<21x128xf32> -> vector<21x128xf32>
    %99 = arith.addf %94, %98 : vector<21x128xf32>
    %100 = vector.extract_strided_slice %60 {offsets = [8, 0], sizes = [21, 16], strides = [1, 1]} : vector<34x16xbf16> to vector<21x16xbf16>
    %c8 = arith.constant 8 : index
    %c0_70 = arith.constant 0 : index
    %c0_71 = arith.constant 0 : index
    %101 = vector.load %arg8[%c8, %c0_70, %c0_71] : memref<14x16x128xbf16, #tpu.memory_space<vmem>>, vector<1x16x128xbf16>
    %102 = vector.shape_cast %101 : vector<1x16x128xbf16> to vector<16x128xbf16>
    %cst_72 = arith.constant dense<0.000000e+00> : vector<21x128xf32>
    %103 = tpu.matmul %100, %102, %cst_72 {dimension_numbers = #tpu.dot_dimension_numbers<[1], [0], [0], [1], [0, 0, 1, 1], [], []>} : vector<21x16xbf16>, vector<16x128xbf16>, vector<21x128xf32> -> vector<21x128xf32>
    %104 = arith.addf %99, %103 : vector<21x128xf32>
    %105 = vector.extract_strided_slice %60 {offsets = [9, 0], sizes = [21, 16], strides = [1, 1]} : vector<34x16xbf16> to vector<21x16xbf16>
    %c9 = arith.constant 9 : index
    %c0_73 = arith.constant 0 : index
    %c0_74 = arith.constant 0 : index
    %106 = vector.load %arg8[%c9, %c0_73, %c0_74] : memref<14x16x128xbf16, #tpu.memory_space<vmem>>, vector<1x16x128xbf16>
    %107 = vector.shape_cast %106 : vector<1x16x128xbf16> to vector<16x128xbf16>
    %cst_75 = arith.constant dense<0.000000e+00> : vector<21x128xf32>
    %108 = tpu.matmul %105, %107, %cst_75 {dimension_numbers = #tpu.dot_dimension_numbers<[1], [0], [0], [1], [0, 0, 1, 1], [], []>} : vector<21x16xbf16>, vector<16x128xbf16>, vector<21x128xf32> -> vector<21x128xf32>
    %109 = arith.addf %104, %108 : vector<21x128xf32>
    %110 = vector.extract_strided_slice %60 {offsets = [10, 0], sizes = [21, 16], strides = [1, 1]} : vector<34x16xbf16> to vector<21x16xbf16>
    %c10 = arith.constant 10 : index
    %c0_76 = arith.constant 0 : index
    %c0_77 = arith.constant 0 : index
    %111 = vector.load %arg8[%c10, %c0_76, %c0_77] : memref<14x16x128xbf16, #tpu.memory_space<vmem>>, vector<1x16x128xbf16>
    %112 = vector.shape_cast %111 : vector<1x16x128xbf16> to vector<16x128xbf16>
    %cst_78 = arith.constant dense<0.000000e+00> : vector<21x128xf32>
    %113 = tpu.matmul %110, %112, %cst_78 {dimension_numbers = #tpu.dot_dimension_numbers<[1], [0], [0], [1], [0, 0, 1, 1], [], []>} : vector<21x16xbf16>, vector<16x128xbf16>, vector<21x128xf32> -> vector<21x128xf32>
    %114 = arith.addf %109, %113 : vector<21x128xf32>
    %115 = vector.extract_strided_slice %60 {offsets = [11, 0], sizes = [21, 16], strides = [1, 1]} : vector<34x16xbf16> to vector<21x16xbf16>
    %c11 = arith.constant 11 : index
    %c0_79 = arith.constant 0 : index
    %c0_80 = arith.constant 0 : index
    %116 = vector.load %arg8[%c11, %c0_79, %c0_80] : memref<14x16x128xbf16, #tpu.memory_space<vmem>>, vector<1x16x128xbf16>
    %117 = vector.shape_cast %116 : vector<1x16x128xbf16> to vector<16x128xbf16>
    %cst_81 = arith.constant dense<0.000000e+00> : vector<21x128xf32>
    %118 = tpu.matmul %115, %117, %cst_81 {dimension_numbers = #tpu.dot_dimension_numbers<[1], [0], [0], [1], [0, 0, 1, 1], [], []>} : vector<21x16xbf16>, vector<16x128xbf16>, vector<21x128xf32> -> vector<21x128xf32>
    %119 = arith.addf %114, %118 : vector<21x128xf32>
    %120 = vector.extract_strided_slice %60 {offsets = [12, 0], sizes = [21, 16], strides = [1, 1]} : vector<34x16xbf16> to vector<21x16xbf16>
    %c12 = arith.constant 12 : index
    %c0_82 = arith.constant 0 : index
    %c0_83 = arith.constant 0 : index
    %121 = vector.load %arg8[%c12, %c0_82, %c0_83] : memref<14x16x128xbf16, #tpu.memory_space<vmem>>, vector<1x16x128xbf16>
    %122 = vector.shape_cast %121 : vector<1x16x128xbf16> to vector<16x128xbf16>
    %cst_84 = arith.constant dense<0.000000e+00> : vector<21x128xf32>
    %123 = tpu.matmul %120, %122, %cst_84 {dimension_numbers = #tpu.dot_dimension_numbers<[1], [0], [0], [1], [0, 0, 1, 1], [], []>} : vector<21x16xbf16>, vector<16x128xbf16>, vector<21x128xf32> -> vector<21x128xf32>
    %124 = arith.addf %119, %123 : vector<21x128xf32>
    %125 = vector.extract_strided_slice %60 {offsets = [13, 0], sizes = [21, 16], strides = [1, 1]} : vector<34x16xbf16> to vector<21x16xbf16>
    %c13 = arith.constant 13 : index
    %c0_85 = arith.constant 0 : index
    %c0_86 = arith.constant 0 : index
    %126 = vector.load %arg8[%c13, %c0_85, %c0_86] : memref<14x16x128xbf16, #tpu.memory_space<vmem>>, vector<1x16x128xbf16>
    %127 = vector.shape_cast %126 : vector<1x16x128xbf16> to vector<16x128xbf16>
    %cst_87 = arith.constant dense<0.000000e+00> : vector<21x128xf32>
    %128 = tpu.matmul %125, %127, %cst_87 {dimension_numbers = #tpu.dot_dimension_numbers<[1], [0], [0], [1], [0, 0, 1, 1], [], []>} : vector<21x16xbf16>, vector<16x128xbf16>, vector<21x128xf32> -> vector<21x128xf32>
    %129 = arith.addf %124, %128 : vector<21x128xf32>
    %c0_88 = arith.constant 0 : index
    %c0_89 = arith.constant 0 : index
    %130 = vector.load %arg9[%c0_88, %c0_89] : memref<1x128xf32, #tpu.memory_space<vmem>>, vector<1x128xf32>
    %131 = vector.broadcast %130 : vector<1x128xf32> to vector<21x128xf32>
    %132 = arith.addf %129, %131 : vector<21x128xf32>
    %cst_90 = arith.constant 0.000000e+00 : f32
    %133 = vector.broadcast %cst_90 : f32 to vector<21x128xf32>
    %134 = arith.maximumf %132, %133 : vector<21x128xf32>
    %135 = arith.truncf %134 : vector<21x128xf32> to vector<21x128xbf16>
    %c0_91 = arith.constant 0 : index
    %c0_92 = arith.constant 0 : index
    %136 = vector.load %arg12[%c0_91, %c0_92] : memref<2x21xbf16, #tpu.memory_space<vmem>>, vector<2x21xbf16>
    %cst_93 = arith.constant dense<0.000000e+00> : vector<2x128xf32>
    %137 = tpu.matmul %136, %135, %cst_93 {dimension_numbers = #tpu.dot_dimension_numbers<[1], [0], [0], [1], [0, 0, 1, 1], [], []>} : vector<2x21xbf16>, vector<21x128xbf16>, vector<2x128xf32> -> vector<2x128xf32>
    %138 = arith.truncf %137 : vector<2x128xf32> to vector<2x128xbf16>
    %c0_94 = arith.constant 0 : index
    %c0_95 = arith.constant 0 : index
    %139 = vector.load %arg10[%c0_94, %c0_95] : memref<128x128xbf16, #tpu.memory_space<vmem>>, vector<128x128xbf16>
    %cst_96 = arith.constant dense<0.000000e+00> : vector<2x128xf32>
    %140 = tpu.matmul %138, %139, %cst_96 {dimension_numbers = #tpu.dot_dimension_numbers<[1], [0], [0], [1], [0, 0, 1, 1], [], []>} : vector<2x128xbf16>, vector<128x128xbf16>, vector<2x128xf32> -> vector<2x128xf32>
    %c0_97 = arith.constant 0 : index
    %c0_98 = arith.constant 0 : index
    %141 = vector.load %arg11[%c0_97, %c0_98] : memref<1x128xf32, #tpu.memory_space<vmem>>, vector<1x128xf32>
    %142 = vector.broadcast %141 : vector<1x128xf32> to vector<2x128xf32>
    %143 = arith.addf %140, %142 : vector<2x128xf32>
    %c0_99 = arith.constant 0 : index
    %c0_100 = arith.constant 0 : index
    %144 = vector.load %arg13[%c0_99, %c0_100] : memref<2x128xf32, #tpu.memory_space<vmem>>, vector<2x128xf32>
    tpu.vector_store %arg13[%c0_99, %c0_100], %143 {strides = array<i32>} : memref<2x128xf32, #tpu.memory_space<vmem>>, vector<2x128xf32>,
    return
  }
  func.func @transform_0(%arg0: i32) -> (i32, i32) {
    %c0_i32 = arith.constant 0 : i32
    %c0_i32_0 = arith.constant 0 : i32
    return %arg0, %c0_i32 : i32, i32
  }
  func.func @transform_1(%arg0: i32) -> (i32, i32, i32) {
    %c0_i32 = arith.constant 0 : i32
    %c0_i32_0 = arith.constant 0 : i32
    %c0_i32_1 = arith.constant 0 : i32
    %c0_i32_2 = arith.constant 0 : i32
    return %c0_i32, %c0_i32_0, %c0_i32_1 : i32, i32, i32
  }
  func.func @transform_2(%arg0: i32) -> (i32, i32) {
    %c0_i32 = arith.constant 0 : i32
    %c0_i32_0 = arith.constant 0 : i32
    %c0_i32_1 = arith.constant 0 : i32
    return %c0_i32, %c0_i32_0 : i32, i32
  }
  func.func @transform_3(%arg0: i32) -> (i32, i32, i32) {
    %c0_i32 = arith.constant 0 : i32
    %c0_i32_0 = arith.constant 0 : i32
    %c0_i32_1 = arith.constant 0 : i32
    %c0_i32_2 = arith.constant 0 : i32
    return %c0_i32, %c0_i32_0, %c0_i32_1 : i32, i32, i32
  }
  func.func @transform_4(%arg0: i32) -> (i32, i32) {
    %c0_i32 = arith.constant 0 : i32
    %c0_i32_0 = arith.constant 0 : i32
    %c0_i32_1 = arith.constant 0 : i32
    return %c0_i32, %c0_i32_0 : i32, i32
  }
  func.func @transform_5(%arg0: i32) -> (i32, i32, i32) {
    %c0_i32 = arith.constant 0 : i32
    %c0_i32_0 = arith.constant 0 : i32
    %c0_i32_1 = arith.constant 0 : i32
    %c0_i32_2 = arith.constant 0 : i32
    return %c0_i32, %c0_i32_0, %c0_i32_1 : i32, i32, i32
  }
  func.func @transform_6(%arg0: i32) -> (i32, i32) {
    %c0_i32 = arith.constant 0 : i32
    %c0_i32_0 = arith.constant 0 : i32
    %c0_i32_1 = arith.constant 0 : i32
    return %c0_i32, %c0_i32_0 : i32, i32
  }
  func.func @transform_7(%arg0: i32) -> (i32, i32, i32) {
    %c0_i32 = arith.constant 0 : i32
    %c0_i32_0 = arith.constant 0 : i32
    %c0_i32_1 = arith.constant 0 : i32
    %c0_i32_2 = arith.constant 0 : i32
    return %c0_i32, %c0_i32_0, %c0_i32_1 : i32, i32, i32
  }
  func.func @transform_8(%arg0: i32) -> (i32, i32) {
    %c0_i32 = arith.constant 0 : i32
    %c0_i32_0 = arith.constant 0 : i32
    %c0_i32_1 = arith.constant 0 : i32
    return %c0_i32, %c0_i32_0 : i32, i32
  }
  func.func @transform_9(%arg0: i32) -> (i32, i32) {
    %c0_i32 = arith.constant 0 : i32
    %c0_i32_0 = arith.constant 0 : i32
    %c0_i32_1 = arith.constant 0 : i32
    return %c0_i32, %c0_i32_0 : i32, i32
  }
  func.func @transform_10(%arg0: i32) -> (i32, i32) {
    %c0_i32 = arith.constant 0 : i32
    %c0_i32_0 = arith.constant 0 : i32
    %c0_i32_1 = arith.constant 0 : i32
    return %c0_i32, %c0_i32_0 : i32, i32
  }
  func.func @transform_11(%arg0: i32) -> (i32, i32) {
    %c0_i32 = arith.constant 0 : i32
    %c0_i32_0 = arith.constant 0 : i32
    %c0_i32_1 = arith.constant 0 : i32
    return %c0_i32, %c0_i32_0 : i32, i32
  }
  func.func @transform_12(%arg0: i32) -> (i32, i32) {
    %c0_i32 = arith.constant 0 : i32
    %c0_i32_0 = arith.constant 0 : i32
    return %arg0, %c0_i32 : i32, i32
  }
}

</mosaic_0001>

<llo_original>
// kernel: tpu_custom_call.1
$region0: #{tpu_custom_call.1}
  #allocation0 [shape = 'u32[]', space=smem, size = 0x4, offset = 0x4, fixed_abs, tag = 'smem constant byte address 0x4 - core index']
  #allocation1 [shape = 'u32[72,128]{1,0:T(1,128)}', space=vmem, size = 0x9000, scoped, tag = 'internal scratch']
  %s0 = inlined_call_operand.vmem [shape: bf16[40,8], index: 0, kind: input, shape index: {}]
  %s1 = inlined_call_operand.hbm [shape: bf16[3,8,16], index: 1, kind: input, shape index: {}]
  %s2 = inlined_call_operand.vmem [shape: f32[1,16], index: 2, kind: input, shape index: {}]
  %s3 = inlined_call_operand.vmem [shape: bf16[3,16,16], index: 3, kind: input, shape index: {}]
  %s4 = inlined_call_operand.vmem [shape: f32[1,16], index: 4, kind: input, shape index: {}]
  %s5 = inlined_call_operand.hbm [shape: bf16[3,16,16], index: 5, kind: input, shape index: {}]
  %s6 = inlined_call_operand.vmem [shape: f32[1,16], index: 6, kind: input, shape index: {}]
  %s7 = inlined_call_operand.hbm [shape: bf16[14,16,128], index: 7, kind: input, shape index: {}]
  %s8 = inlined_call_operand.vmem [shape: f32[1,128], index: 8, kind: input, shape index: {}]
  %s9 = inlined_call_operand.hbm [shape: bf16[128,128], index: 9, kind: input, shape index: {}]
  %s10 = inlined_call_operand.vmem [shape: f32[1,128], index: 10, kind: input, shape index: {}]
  %s11 = inlined_call_operand.vmem [shape: bf16[2,21], index: 11, kind: input, shape index: {}]
  %s12 = inlined_call_operand.hbm [shape: f32[2,128], index: 12, kind: output, shape index: {}]
  %s13 = sld [smem:[#allocation0]]
  $region74: #{tpu_custom_call.1} parent=0
    _
  %s15 = ssub.s32 1, %s13
  %s16 = scalar_select 0, %s15, %s13
  $region1: #{tpu_custom_call.1} parent=0
    #allocation2 [shape = 'u8[6144]{0}', space=vmem, size = 0x1800, scoped, tag = 'input window, operand 1, single buffered']
    #allocation3 [shape = 's32[1]{0}', space=sflag, size = 0x4, scoped, tag = 'scoped memory for tpu_custom_call.1']
    #allocation4 [shape = 's32[1]{0}', space=sflag, size = 0x4, scoped, tag = 'scoped memory for tpu_custom_call.1']
    #allocation5 [shape = 'u8[12288]{0}', space=vmem, size = 0x3000, scoped, tag = 'input window, operand 5, single buffered']
    #allocation6 [shape = 's32[1]{0}', space=sflag, size = 0x4, scoped, tag = 'scoped memory for tpu_custom_call.1']
    #allocation7 [shape = 'u8[57344]{0}', space=vmem, size = 0xe000, scoped, tag = 'input window, operand 7, single buffered']
    #allocation8 [shape = 'u8[32768]{0}', space=vmem, size = 0x8000, scoped, tag = 'input window, operand 9, single buffered']
    #allocation9 [shape = 's32[1]{0}', space=sflag, size = 0x4, scoped, tag = 'scoped memory for tpu_custom_call.1']
    #allocation10 [shape = 'u8[1024]{0}', space=vmem, size = 0x400, scoped, tag = 'output window, operand 0, single buffered']
    %17 = vsyncpa [#allocation3], 0
    %18 = vsyncpa [#allocation6], 0
    %19 = vsyncpa [#allocation9], 0
    %20 = vsyncpa [#allocation4], 0
    // Predicated region
    $region2: #{tpu_custom_call.1} parent=1 // pred_check
      _
    $region3: #{tpu_custom_call.1} parent=1 // pred_check_branch
      %22 = sbr.rel (0) target = $region5
    $region4: #{tpu_custom_call.1} parent=1 // pred_region
      _
    $region5: #{tpu_custom_call.1} parent=1 // pred_fallthru
      _
    // Predicated region
    $region6: #{tpu_custom_call.1} parent=1 // pred_check
      _
    $region7: #{tpu_custom_call.1} parent=1 // pred_check_branch
      %24 = sbr.rel (0) target = $region9
    $region8: #{tpu_custom_call.1} parent=1 // pred_region
      %26 = vsyncadd [#allocation3], 0
      %s27 = sshll.u32 %s1, 4
      %s28 = int_to_ptr.hbm [resolvable:$true] %s27
      %s29 = sshll.u32 [#allocation2], 4
      %s30 = int_to_ptr.vmem [resolvable:$true] %s29
      %35 = dma.hbm_to_vmem [thread:$0]  %s28, 192, %s30, [#allocation3], 64, 64, 4
    $region9: #{tpu_custom_call.1} parent=1 // pred_fallthru
      _
    // Predicated region
    $region10: #{tpu_custom_call.1} parent=1 // pred_check
      _
    $region11: #{tpu_custom_call.1} parent=1 // pred_check_branch
      %37 = sbr.rel (0) target = $region13
    $region12: #{tpu_custom_call.1} parent=1 // pred_region
      _
    $region13: #{tpu_custom_call.1} parent=1 // pred_fallthru
      _
    // Predicated region
    $region14: #{tpu_custom_call.1} parent=1 // pred_check
      _
    $region15: #{tpu_custom_call.1} parent=1 // pred_check_branch
      %39 = sbr.rel (0) target = $region17
    $region16: #{tpu_custom_call.1} parent=1 // pred_region
      _
    $region17: #{tpu_custom_call.1} parent=1 // pred_fallthru
      _
    // Predicated region
    $region18: #{tpu_custom_call.1} parent=1 // pred_check
      _
    $region19: #{tpu_custom_call.1} parent=1 // pred_check_branch
      %41 = sbr.rel (0) target = $region21
    $region20: #{tpu_custom_call.1} parent=1 // pred_region
      _
    $region21: #{tpu_custom_call.1} parent=1 // pred_fallthru
      _
    // Predicated region
    $region22: #{tpu_custom_call.1} parent=1 // pred_check
      _
    $region23: #{tpu_custom_call.1} parent=1 // pred_check_branch
      %43 = sbr.rel (0) target = $region25
    $region24: #{tpu_custom_call.1} parent=1 // pred_region
      %45 = vsyncadd [#allocation6], 0
      %s46 = sshll.u32 %s5, 4
      %s47 = int_to_ptr.hbm [resolvable:$true] %s46
      %s48 = sshll.u32 [#allocation5], 4
      %s49 = int_to_ptr.vmem [resolvable:$true] %s48
      %54 = dma.hbm_to_vmem [thread:$0]  %s47, 384, %s49, [#allocation6], 64, 64, 4
    $region25: #{tpu_custom_call.1} parent=1 // pred_fallthru
      _
    // Predicated region
    $region26: #{tpu_custom_call.1} parent=1 // pred_check
      _
    $region27: #{tpu_custom_call.1} parent=1 // pred_check_branch
      %56 = sbr.rel (0) target = $region29
    $region28: #{tpu_custom_call.1} parent=1 // pred_region
      _
    $region29: #{tpu_custom_call.1} parent=1 // pred_fallthru
      _
    // Predicated region
    $region30: #{tpu_custom_call.1} parent=1 // pred_check
      _
    $region31: #{tpu_custom_call.1} parent=1 // pred_check_branch
      %58 = sbr.rel (0) target = $region33
    $region32: #{tpu_custom_call.1} parent=1 // pred_region
      %60 = vsyncadd [#allocation6], 0
      %s61 = sshll.u32 %s7, 4
      %s62 = int_to_ptr.hbm [resolvable:$true] %s61
      %s63 = sshll.u32 [#allocation7], 4
      %s64 = int_to_ptr.vmem [resolvable:$true] %s63
      %69 = dma.hbm_to_vmem [thread:$0]  %s62, 1792, %s64, [#allocation6], 64, 64, 4
    $region33: #{tpu_custom_call.1} parent=1 // pred_fallthru
      _
    // Predicated region
    $region34: #{tpu_custom_call.1} parent=1 // pred_check
      _
    $region35: #{tpu_custom_call.1} parent=1 // pred_check_branch
      %71 = sbr.rel (0) target = $region37
    $region36: #{tpu_custom_call.1} parent=1 // pred_region
      _
    $region37: #{tpu_custom_call.1} parent=1 // pred_fallthru
      _
    // Predicated region
    $region38: #{tpu_custom_call.1} parent=1 // pred_check
      _
    $region39: #{tpu_custom_call.1} parent=1 // pred_check_branch
      %73 = sbr.rel (0) target = $region41
    $region40: #{tpu_custom_call.1} parent=1 // pred_region
      %75 = vsyncadd [#allocation9], 0
      %s76 = sshll.u32 %s9, 4
      %s77 = int_to_ptr.hbm [resolvable:$true] %s76
      %s78 = sshll.u32 [#allocation8], 4
      %s79 = int_to_ptr.vmem [resolvable:$true] %s78
      %84 = dma.hbm_to_vmem [thread:$0]  %s77, 1024, %s79, [#allocation9], 64, 64, 4
    $region41: #{tpu_custom_call.1} parent=1 // pred_fallthru
      _
    // Predicated region
    $region42: #{tpu_custom_call.1} parent=1 // pred_check
      _
    $region43: #{tpu_custom_call.1} parent=1 // pred_check_branch
      %86 = sbr.rel (0) target = $region45
    $region44: #{tpu_custom_call.1} parent=1 // pred_region
      _
    $region45: #{tpu_custom_call.1} parent=1 // pred_fallthru
      _
    // Predicated region
    $region46: #{tpu_custom_call.1} parent=1 // pred_check
      _
    $region47: #{tpu_custom_call.1} parent=1 // pred_check_branch
      %88 = sbr.rel (0) target = $region49
    $region48: #{tpu_custom_call.1} parent=1 // pred_region
      _
    $region49: #{tpu_custom_call.1} parent=1 // pred_fallthru
      _
    // Predicated region
    $region50: #{tpu_custom_call.1} parent=1 // pred_check
      _
    $region51: #{tpu_custom_call.1} parent=1 // pred_check_branch
      %90 = sbr.rel (0) target = $region53
    $region52: #{tpu_custom_call.1} parent=1 // pred_region
      %92 = dma.done [#allocation3], 192
    $region53: #{tpu_custom_call.1} parent=1 // pred_fallthru
      _
    // Predicated region
    $region54: #{tpu_custom_call.1} parent=1 // pred_check
      _
    $region55: #{tpu_custom_call.1} parent=1 // pred_check_branch
      %94 = sbr.rel (0) target = $region57
    $region56: #{tpu_custom_call.1} parent=1 // pred_region
      %96 = dma.done [#allocation6], 384
    $region57: #{tpu_custom_call.1} parent=1 // pred_fallthru
      _
    // Predicated region
    $region58: #{tpu_custom_call.1} parent=1 // pred_check
      _
    $region59: #{tpu_custom_call.1} parent=1 // pred_check_branch
      %98 = sbr.rel (0) target = $region61
    $region60: #{tpu_custom_call.1} parent=1 // pred_region
      %100 = dma.done [#allocation6], 1792
    $region61: #{tpu_custom_call.1} parent=1 // pred_fallthru
      _
    // Predicated region
    $region62: #{tpu_custom_call.1} parent=1 // pred_check
      _
    $region63: #{tpu_custom_call.1} parent=1 // pred_check_branch
      %102 = sbr.rel (0) target = $region65
    $region64: #{tpu_custom_call.1} parent=1 // pred_region
      %104 = dma.done [#allocation9], 1024
    $region65: #{tpu_custom_call.1} parent=1 // pred_fallthru
      _
    %v106 = vld [vmem:[%s0] sm:$0xf]
    %v107 = vld [vmem:[%s0 + $0x4] sm:$0xf]
    %v108 = vld [vmem:[%s0 + $0x8] sm:$0xf]
    %v109 = vld [vmem:[%s0 + $0xc] sm:$0xf]
    %v110 = vld [vmem:[%s0 + $0x10] sm:$0xf]
    %v111 = vld [vmem:[#allocation2] sm:$0xf]
    %s112 = scalar_lea.vmem [#allocation2], 4
    %v113 = vld [vmem:[%s112] sm:$0xf]
    %v119 = vunpack.c.l.b16 %v106
    %v120 = vunpack.c.l.b16 %v107
    %v121 = vunpack.c.l.b16 %v108
    %v122 = vunpack.c.l.b16 %v109
    %v123 = vunpack.c.l.b16 %v110
    %v124 = vpack.c.b16 %v120, %v119
    %v125 = vpack.c.b16 %v122, %v121
    %v126 = vpack.c.b16 %v123, %v123
    %vm127 = vsmask.f32 7424
    %v129 = vshrl.u32 %v124, 16
    %v131 = vshll.u32 %v124, 16
    %v133 = vrot.slane %v131, 1
    %v134 = vor.u32 %v129, %v133
    %v136 = vshll.u32 %v125, 16
    %v138 = vrot.slane %v136, 1
    %v139 = vsel %vm127, %v134, %v138
    %v140 = vshrl.u32 %v125, 16
    %v142 = vor.u32 %v140, %v138
    %v144 = vshll.u32 %v126, 16
    %v146 = vrot.slane %v144, 1
    %v147 = vsel %vm127, %v142, %v146
    %v148 = vshrl.u32 %v126, 16
    %v150 = vor.u32 %v148, %v146
    %vm151 = vcmask 64512
    %v153 = vsel %vm151, %v139, 0
    %v156 = vsel %vm151, %v147, 0
    %v159 = vsel %vm151, %v150, 0
    %vm161 = vcmask 1043456
    %v163 = vsel %vm161, %v113, 0
    %165 = vmatpush.bf16.msra.mxu0 0
    %166 = vmatpush.bf16.msra.mxu0 0
    %167 = vmatpush.bf16.msra.mxu0 0
    %168 = vmatpush.bf16.msra.mxu0 0
    %169 = vmatpush.bf16.msra.mxu0 0
    %170 = vmatpush.bf16.msra.mxu0 0
    %171 = vmatpush.bf16.msra.mxu0 0
    %172 = vmatpush.bf16.msra.mxu0 %v163
    %173 = vmatmul.bf16.gmra.mxu0 %v153
    %v174 = vpop.f32.mrf.mxu0
    %v175 = vadd.f32 0.0, %v174
    %v176 = vpop.f32.mrf.mxu0
    %v177 = vadd.f32 0.0, %v176
    %178 = vmatmul.bf16.gmra.mxu0 %v156
    %v179 = vpop.f32.mrf.mxu0
    %v180 = vadd.f32 0.0, %v179
    %v181 = vpop.f32.mrf.mxu0
    %v182 = vadd.f32 0.0, %v181
    %183 = vmatmul.bf16.gmra.mxu0 %v159
    %v184 = vpop.f32.mrf.mxu0
    %v185 = vadd.f32 0.0, %v184
    %v186 = vpop.f32.mrf.mxu0
    %187 = vdwg.mxu0
    %v188 = vsel %vm151, %v124, 0
    %v190 = vsel %vm151, %v125, 0
    %v192 = vsel %vm151, %v126, 0
    %v195 = vsel %vm161, %v111, 0
    %197 = vmatpush.bf16.msra.mxu0 0
    %198 = vmatpush.bf16.msra.mxu0 0
    %199 = vmatpush.bf16.msra.mxu0 0
    %200 = vmatpush.bf16.msra.mxu0 0
    %201 = vmatpush.bf16.msra.mxu0 0
    %202 = vmatpush.bf16.msra.mxu0 0
    %203 = vmatpush.bf16.msra.mxu0 0
    %204 = vmatpush.bf16.msra.mxu0 %v195
    %205 = vmatmul.bf16.gmra.mxu0 %v188
    %v206 = vpop.f32.mrf.mxu0
    %v207 = vadd.f32 %v175, %v206
    %v208 = vpop.f32.mrf.mxu0
    %v209 = vadd.f32 %v177, %v208
    %210 = vmatmul.bf16.gmra.mxu0 %v190
    %v211 = vpop.f32.mrf.mxu0
    %v212 = vadd.f32 %v180, %v211
    %v213 = vpop.f32.mrf.mxu0
    %v214 = vadd.f32 %v182, %v213
    %215 = vmatmul.bf16.gmra.mxu0 %v192
    %v216 = vpop.f32.mrf.mxu0
    %v217 = vadd.f32 %v185, %v216
    %v218 = vpop.f32.mrf.mxu0
    %219 = vdwg.mxu0
    %s220 = scalar_lea.vmem [#allocation2], 8
    %v221 = vld [vmem:[%s220] sm:$0xf]
    %vm222 = vcmask 1046528
    %v223 = vrot.slane %v124, 1
    %v224 = vrot.slane %v125, 1
    %v225 = vsel %vm222, %v223, %v224
    %v226 = vrot.slane %v126, 1
    %v227 = vsel %vm222, %v224, %v226
    %v229 = vsel %vm151, %v225, 0
    %v232 = vsel %vm151, %v227, 0
    %v235 = vsel %vm151, %v226, 0
    %v238 = vsel %vm161, %v221, 0
    %240 = vmatpush.bf16.msra.mxu0 0
    %241 = vmatpush.bf16.msra.mxu0 0
    %242 = vmatpush.bf16.msra.mxu0 0
    %243 = vmatpush.bf16.msra.mxu0 0
    %244 = vmatpush.bf16.msra.mxu0 0
    %245 = vmatpush.bf16.msra.mxu0 0
    %246 = vmatpush.bf16.msra.mxu0 0
    %247 = vmatpush.bf16.msra.mxu0 %v238
    %248 = vmatmul.bf16.gmra.mxu0 %v229
    %v249 = vpop.f32.mrf.mxu0
    %v250 = vadd.f32 0.0, %v249
    %v251 = vpop.f32.mrf.mxu0
    %v252 = vadd.f32 0.0, %v251
    %253 = vmatmul.bf16.gmra.mxu0 %v232
    %v254 = vpop.f32.mrf.mxu0
    %v255 = vadd.f32 0.0, %v254
    %v256 = vpop.f32.mrf.mxu0
    %v257 = vadd.f32 0.0, %v256
    %258 = vmatmul.bf16.gmra.mxu0 %v235
    %v259 = vpop.f32.mrf.mxu0
    %v260 = vadd.f32 0.0, %v259
    %v261 = vpop.f32.mrf.mxu0
    %262 = vdwg.mxu0
    %v263 = vadd.f32 %v207, %v250
    %v264 = vadd.f32 %v209, %v252
    %v265 = vadd.f32 %v212, %v255
    %v266 = vadd.f32 %v214, %v257
    %v267 = vadd.f32 %v217, %v260
    %v268 = vld [vmem:[%s2] sm:$0x1]
    %v270 = vperm.slane %v268, 0
    %v272 = vadd.f32 %v263, %v270
    %v273 = vadd.f32 %v264, %v270
    %v274 = vadd.f32 %v265, %v270
    %v275 = vadd.f32 %v266, %v270
    %v276 = vadd.f32 %v267, %v270
    %v277 = vmax.f32 %v272, 0.0
    %v278 = vmax.f32 %v273, 0.0
    %v279 = vmax.f32 %v274, 0.0
    %v280 = vmax.f32 %v275, 0.0
    %v281 = vmax.f32 %v276, 0.0
    %v282 = vpack.c.bf16 %v277, %v277
    %v283 = vpack.c.bf16 %v278, %v278
    %v284 = vpack.c.bf16 %v279, %v279
    %v285 = vpack.c.bf16 %v280, %v280
    %v286 = vpack.c.bf16 %v281, %v281
    %v287 = vld [vmem:[%s3] sm:$0xf]
    %v288 = vld [vmem:[%s3 + $0x4] sm:$0xf]
    %s289 = scalar_lea.vmem %s3, 8
    %v290 = vld [vmem:[%s289] sm:$0xf]
    %v291 = vld [vmem:[%s289 + $0x4] sm:$0xf]
    %v297 = vunpack.c.l.b16 %v282
    %v298 = vunpack.c.l.b16 %v283
    %v299 = vunpack.c.l.b16 %v284
    %v300 = vunpack.c.l.b16 %v285
    %v301 = vunpack.c.l.b16 %v286
    %v302 = vpack.c.b16 %v298, %v297
    %v303 = vpack.c.b16 %v300, %v299
    %v304 = vpack.c.b16 %v301, %v301
    %v306 = vshrl.u32 %v302, 16
    %v308 = vshll.u32 %v302, 16
    %v310 = vrot.slane %v308, 1
    %v311 = vor.u32 %v306, %v310
    %v313 = vshll.u32 %v303, 16
    %v315 = vrot.slane %v313, 1
    %v316 = vsel %vm127, %v311, %v315
    %v317 = vshrl.u32 %v303, 16
    %v319 = vor.u32 %v317, %v315
    %v321 = vshll.u32 %v304, 16
    %v323 = vrot.slane %v321, 1
    %v324 = vsel %vm127, %v319, %v323
    %v325 = vshrl.u32 %v304, 16
    %v327 = vor.u32 %v325, %v323
    %v330 = vunpack.c.l.b16 %v290
    %v331 = vunpack.c.l.b16 %v291
    %v332 = vpack.c.b16 %v331, %v330
    %vm334 = vcmask 130048
    %v336 = vsel %vm334, %v316, 0
    %v339 = vsel %vm334, %v324, 0
    %v342 = vsel %vm334, %v327, 0
    %344 = vmatpush.bf16.msra.mxu0 0
    %345 = vmatpush.bf16.msra.mxu0 0
    %346 = vmatpush.bf16.msra.mxu0 0
    %347 = vmatpush.bf16.msra.mxu0 0
    %348 = vmatpush.bf16.msra.mxu0 0
    %349 = vmatpush.bf16.msra.mxu0 0
    %350 = vmatpush.bf16.msra.mxu0 0
    %351 = vmatpush.bf16.msra.mxu0 %v332
    %352 = vmatmul.bf16.gmra.mxu0 %v336
    %v353 = vpop.f32.mrf.mxu0
    %v354 = vadd.f32 0.0, %v353
    %v355 = vpop.f32.mrf.mxu0
    %v356 = vadd.f32 0.0, %v355
    %357 = vmatmul.bf16.gmra.mxu0 %v339
    %v358 = vpop.f32.mrf.mxu0
    %v359 = vadd.f32 0.0, %v358
    %v360 = vpop.f32.mrf.mxu0
    %v361 = vadd.f32 0.0, %v360
    %362 = vmatmul.bf16.gmra.mxu0 %v342
    %v363 = vpop.f32.mrf.mxu0
    %v364 = vadd.f32 0.0, %v363
    %v365 = vpop.f32.mrf.mxu0
    %366 = vdwg.mxu0
    %v369 = vunpack.c.l.b16 %v287
    %v370 = vunpack.c.l.b16 %v288
    %v371 = vpack.c.b16 %v370, %v369
    %v373 = vsel %vm334, %v302, 0
    %v375 = vsel %vm334, %v303, 0
    %v377 = vsel %vm334, %v304, 0
    %379 = vmatpush.bf16.msra.mxu0 0
    %380 = vmatpush.bf16.msra.mxu0 0
    %381 = vmatpush.bf16.msra.mxu0 0
    %382 = vmatpush.bf16.msra.mxu0 0
    %383 = vmatpush.bf16.msra.mxu0 0
    %384 = vmatpush.bf16.msra.mxu0 0
    %385 = vmatpush.bf16.msra.mxu0 0
    %386 = vmatpush.bf16.msra.mxu0 %v371
    %387 = vmatmul.bf16.gmra.mxu0 %v373
    %v388 = vpop.f32.mrf.mxu0
    %v389 = vadd.f32 %v354, %v388
    %v390 = vpop.f32.mrf.mxu0
    %v391 = vadd.f32 %v356, %v390
    %392 = vmatmul.bf16.gmra.mxu0 %v375
    %v393 = vpop.f32.mrf.mxu0
    %v394 = vadd.f32 %v359, %v393
    %v395 = vpop.f32.mrf.mxu0
    %v396 = vadd.f32 %v361, %v395
    %397 = vmatmul.bf16.gmra.mxu0 %v377
    %v398 = vpop.f32.mrf.mxu0
    %v399 = vadd.f32 %v364, %v398
    %v400 = vpop.f32.mrf.mxu0
    %401 = vdwg.mxu0
    %s402 = scalar_lea.vmem %s3, 16
    %v403 = vld [vmem:[%s402] sm:$0xf]
    %v404 = vld [vmem:[%s402 + $0x4] sm:$0xf]
    %v405 = vrot.slane %v302, 1
    %v406 = vrot.slane %v303, 1
    %v407 = vsel %vm222, %v405, %v406
    %v408 = vrot.slane %v304, 1
    %v409 = vsel %vm222, %v406, %v408
    %v412 = vunpack.c.l.b16 %v403
    %v413 = vunpack.c.l.b16 %v404
    %v414 = vpack.c.b16 %v413, %v412
    %v417 = vsel %vm334, %v407, 0
    %v420 = vsel %vm334, %v409, 0
    %v423 = vsel %vm334, %v408, 0
    %425 = vmatpush.bf16.msra.mxu0 0
    %426 = vmatpush.bf16.msra.mxu0 0
    %427 = vmatpush.bf16.msra.mxu0 0
    %428 = vmatpush.bf16.msra.mxu0 0
    %429 = vmatpush.bf16.msra.mxu0 0
    %430 = vmatpush.bf16.msra.mxu0 0
    %431 = vmatpush.bf16.msra.mxu0 0
    %432 = vmatpush.bf16.msra.mxu0 %v414
    %433 = vmatmul.bf16.gmra.mxu0 %v417
    %v434 = vpop.f32.mrf.mxu0
    %v435 = vadd.f32 0.0, %v434
    %v436 = vpop.f32.mrf.mxu0
    %v437 = vadd.f32 0.0, %v436
    %438 = vmatmul.bf16.gmra.mxu0 %v420
    %v439 = vpop.f32.mrf.mxu0
    %v440 = vadd.f32 0.0, %v439
    %v441 = vpop.f32.mrf.mxu0
    %v442 = vadd.f32 0.0, %v441
    %443 = vmatmul.bf16.gmra.mxu0 %v423
    %v444 = vpop.f32.mrf.mxu0
    %v445 = vadd.f32 0.0, %v444
    %v446 = vpop.f32.mrf.mxu0
    %447 = vdwg.mxu0
    %v448 = vadd.f32 %v389, %v435
    %v449 = vadd.f32 %v391, %v437
    %v450 = vadd.f32 %v394, %v440
    %v451 = vadd.f32 %v396, %v442
    %v452 = vadd.f32 %v399, %v445
    %v453 = vld [vmem:[%s4] sm:$0x1]
    %v455 = vperm.slane %v453, 0
    %v457 = vadd.f32 %v448, %v455
    %v458 = vadd.f32 %v449, %v455
    %v459 = vadd.f32 %v450, %v455
    %v460 = vadd.f32 %v451, %v455
    %v461 = vadd.f32 %v452, %v455
    %v462 = vmax.f32 %v457, 0.0
    %v463 = vmax.f32 %v458, 0.0
    %v464 = vmax.f32 %v459, 0.0
    %v465 = vmax.f32 %v460, 0.0
    %v466 = vmax.f32 %v461, 0.0
    %v467 = vpack.c.bf16 %v462, %v462
    %v468 = vpack.c.bf16 %v463, %v463
    %v469 = vpack.c.bf16 %v464, %v464
    %v470 = vpack.c.bf16 %v465, %v465
    %v471 = vpack.c.bf16 %v466, %v466
    %v472 = vld [vmem:[#allocation5] sm:$0xf]
    %v473 = vld [vmem:[#allocation5 + $0x4] sm:$0xf]
    %s474 = scalar_lea.vmem [#allocation5], 8
    %v475 = vld [vmem:[%s474] sm:$0xf]
    %v476 = vld [vmem:[%s474 + $0x4] sm:$0xf]
    %v482 = vunpack.c.l.b16 %v467
    %v483 = vunpack.c.l.b16 %v468
    %v484 = vunpack.c.l.b16 %v469
    %v485 = vunpack.c.l.b16 %v470
    %v486 = vunpack.c.l.b16 %v471
    %v487 = vpack.c.b16 %v483, %v482
    %v488 = vpack.c.b16 %v485, %v484
    %v489 = vpack.c.b16 %v486, %v486
    %v491 = vshrl.u32 %v487, 16
    %v493 = vshll.u32 %v487, 16
    %v495 = vrot.slane %v493, 1
    %v496 = vor.u32 %v491, %v495
    %v498 = vshll.u32 %v488, 16
    %v500 = vrot.slane %v498, 1
    %v501 = vsel %vm127, %v496, %v500
    %v502 = vshrl.u32 %v488, 16
    %v504 = vor.u32 %v502, %v500
    %v506 = vshll.u32 %v489, 16
    %v508 = vrot.slane %v506, 1
    %v509 = vsel %vm127, %v504, %v508
    %v510 = vshrl.u32 %v489, 16
    %v512 = vor.u32 %v510, %v508
    %v515 = vunpack.c.l.b16 %v475
    %v516 = vunpack.c.l.b16 %v476
    %v517 = vpack.c.b16 %v516, %v515
    %v520 = vsel %vm334, %v501, 0
    %v523 = vsel %vm334, %v509, 0
    %v526 = vsel %vm334, %v512, 0
    %528 = vmatpush.bf16.msra.mxu0 0
    %529 = vmatpush.bf16.msra.mxu0 0
    %530 = vmatpush.bf16.msra.mxu0 0
    %531 = vmatpush.bf16.msra.mxu0 0
    %532 = vmatpush.bf16.msra.mxu0 0
    %533 = vmatpush.bf16.msra.mxu0 0
    %534 = vmatpush.bf16.msra.mxu0 0
    %535 = vmatpush.bf16.msra.mxu0 %v517
    %536 = vmatmul.bf16.gmra.mxu0 %v520
    %v537 = vpop.f32.mrf.mxu0
    %v538 = vadd.f32 0.0, %v537
    %v539 = vpop.f32.mrf.mxu0
    %v540 = vadd.f32 0.0, %v539
    %541 = vmatmul.bf16.gmra.mxu0 %v523
    %v542 = vpop.f32.mrf.mxu0
    %v543 = vadd.f32 0.0, %v542
    %v544 = vpop.f32.mrf.mxu0
    %v545 = vadd.f32 0.0, %v544
    %546 = vmatmul.bf16.gmra.mxu0 %v526
    %v547 = vpop.f32.mrf.mxu0
    %v548 = vadd.f32 0.0, %v547
    %v549 = vpop.f32.mrf.mxu0
    %550 = vdwg.mxu0
    %v553 = vunpack.c.l.b16 %v472
    %v554 = vunpack.c.l.b16 %v473
    %v555 = vpack.c.b16 %v554, %v553
    %v557 = vsel %vm334, %v487, 0
    %v559 = vsel %vm334, %v488, 0
    %v561 = vsel %vm334, %v489, 0
    %563 = vmatpush.bf16.msra.mxu0 0
    %564 = vmatpush.bf16.msra.mxu0 0
    %565 = vmatpush.bf16.msra.mxu0 0
    %566 = vmatpush.bf16.msra.mxu0 0
    %567 = vmatpush.bf16.msra.mxu0 0
    %568 = vmatpush.bf16.msra.mxu0 0
    %569 = vmatpush.bf16.msra.mxu0 0
    %570 = vmatpush.bf16.msra.mxu0 %v555
    %571 = vmatmul.bf16.gmra.mxu0 %v557
    %v572 = vpop.f32.mrf.mxu0
    %v573 = vadd.f32 %v538, %v572
    %v574 = vpop.f32.mrf.mxu0
    %v575 = vadd.f32 %v540, %v574
    %576 = vmatmul.bf16.gmra.mxu0 %v559
    %v577 = vpop.f32.mrf.mxu0
    %v578 = vadd.f32 %v543, %v577
    %v579 = vpop.f32.mrf.mxu0
    %v580 = vadd.f32 %v545, %v579
    %581 = vmatmul.bf16.gmra.mxu0 %v561
    %v582 = vpop.f32.mrf.mxu0
    %v583 = vadd.f32 %v548, %v582
    %v584 = vpop.f32.mrf.mxu0
    %585 = vdwg.mxu0
    %s586 = scalar_lea.vmem [#allocation5], 16
    %v587 = vld [vmem:[%s586] sm:$0xf]
    %v588 = vld [vmem:[%s586 + $0x4] sm:$0xf]
    %v589 = vrot.slane %v487, 1
    %v590 = vrot.slane %v488, 1
    %v591 = vsel %vm222, %v589, %v590
    %v592 = vrot.slane %v489, 1
    %v593 = vsel %vm222, %v590, %v592
    %v596 = vunpack.c.l.b16 %v587
    %v597 = vunpack.c.l.b16 %v588
    %v598 = vpack.c.b16 %v597, %v596
    %v601 = vsel %vm334, %v591, 0
    %v604 = vsel %vm334, %v593, 0
    %v607 = vsel %vm334, %v592, 0
    %609 = vmatpush.bf16.msra.mxu0 0
    %610 = vmatpush.bf16.msra.mxu0 0
    %611 = vmatpush.bf16.msra.mxu0 0
    %612 = vmatpush.bf16.msra.mxu0 0
    %613 = vmatpush.bf16.msra.mxu0 0
    %614 = vmatpush.bf16.msra.mxu0 0
    %615 = vmatpush.bf16.msra.mxu0 0
    %616 = vmatpush.bf16.msra.mxu0 %v598
    %617 = vmatmul.bf16.gmra.mxu0 %v601
    %v618 = vpop.f32.mrf.mxu0
    %v619 = vadd.f32 0.0, %v618
    %v620 = vpop.f32.mrf.mxu0
    %v621 = vadd.f32 0.0, %v620
    %622 = vmatmul.bf16.gmra.mxu0 %v604
    %v623 = vpop.f32.mrf.mxu0
    %v624 = vadd.f32 0.0, %v623
    %v625 = vpop.f32.mrf.mxu0
    %v626 = vadd.f32 0.0, %v625
    %627 = vmatmul.bf16.gmra.mxu0 %v607
    %v628 = vpop.f32.mrf.mxu0
    %v629 = vadd.f32 0.0, %v628
    %v630 = vpop.f32.mrf.mxu0
    %631 = vdwg.mxu0
    %v632 = vadd.f32 %v573, %v619
    %v633 = vadd.f32 %v575, %v621
    %v634 = vadd.f32 %v578, %v624
    %v635 = vadd.f32 %v580, %v626
    %v636 = vadd.f32 %v583, %v629
    %v637 = vld [vmem:[%s6] sm:$0x1]
    %v639 = vperm.slane %v637, 0
    %v641 = vadd.f32 %v632, %v639
    %v642 = vadd.f32 %v633, %v639
    %v643 = vadd.f32 %v634, %v639
    %v644 = vadd.f32 %v635, %v639
    %v645 = vadd.f32 %v636, %v639
    %v646 = vmax.f32 %v641, 0.0
    %v647 = vmax.f32 %v642, 0.0
    %v648 = vmax.f32 %v643, 0.0
    %v649 = vmax.f32 %v644, 0.0
    %v650 = vmax.f32 %v645, 0.0
    %v651 = vpack.c.bf16 %v646, %v646
    %v652 = vpack.c.bf16 %v647, %v647
    %v653 = vpack.c.bf16 %v648, %v648
    %v654 = vpack.c.bf16 %v649, %v649
    %v655 = vpack.c.bf16 %v650, %v650
    %v656 = vld [vmem:[#allocation7] sm:$0xf]
    %v657 = vld [vmem:[#allocation7 + $0x4] sm:$0xf]
    %s658 = scalar_lea.vmem [#allocation7], 8
    %v659 = vld [vmem:[%s658] sm:$0xf]
    %v660 = vld [vmem:[%s658 + $0x4] sm:$0xf]
    %v664 = vunpack.c.l.b16 %v651
    %v665 = vunpack.c.l.b16 %v652
    %v666 = vunpack.c.l.b16 %v653
    %v667 = vpack.c.b16 %v665, %v664
    %v668 = vpack.c.b16 %v666, %v666
    %v670 = vshrl.u32 %v667, 16
    %v672 = vshll.u32 %v667, 16
    %v674 = vrot.slane %v672, 1
    %v675 = vor.u32 %v670, %v674
    %v677 = vshll.u32 %v668, 16
    %v679 = vrot.slane %v677, 1
    %v680 = vsel %vm127, %v675, %v679
    %v681 = vshrl.u32 %v668, 16
    %v683 = vor.u32 %v681, %v679
    %v686 = vunpack.c.l.b16 %v659
    %v687 = vunpack.c.l.b16 %v660
    %v688 = vpack.c.b16 %v687, %v686
    %v691 = vsel %vm334, %v680, 0
    %v694 = vsel %vm334, %v683, 0
    %696 = vmatpush.bf16.msra.mxu0 0
    %697 = vmatpush.bf16.msra.mxu0 0
    %698 = vmatpush.bf16.msra.mxu0 0
    %699 = vmatpush.bf16.msra.mxu0 0
    %700 = vmatpush.bf16.msra.mxu0 0
    %701 = vmatpush.bf16.msra.mxu0 0
    %702 = vmatpush.bf16.msra.mxu0 0
    %703 = vmatpush.bf16.msra.mxu0 %v688
    %704 = vmatmul.bf16.gmra.mxu0 %v691
    %v705 = vpop.f32.mrf.mxu0
    %v706 = vadd.f32 0.0, %v705
    %v707 = vpop.f32.mrf.mxu0
    %v708 = vadd.f32 0.0, %v707
    %709 = vmatmul.bf16.gmra.mxu0 %v694
    %v710 = vpop.f32.mrf.mxu0
    %v711 = vadd.f32 0.0, %v710
    %v712 = vpop.f32.mrf.mxu0
    %713 = vdwg.mxu0
    %v716 = vunpack.c.l.b16 %v656
    %v717 = vunpack.c.l.b16 %v657
    %v718 = vpack.c.b16 %v717, %v716
    %v720 = vsel %vm334, %v667, 0
    %v722 = vsel %vm334, %v668, 0
    %724 = vmatpush.bf16.msra.mxu0 0
    %725 = vmatpush.bf16.msra.mxu0 0
    %726 = vmatpush.bf16.msra.mxu0 0
    %727 = vmatpush.bf16.msra.mxu0 0
    %728 = vmatpush.bf16.msra.mxu0 0
    %729 = vmatpush.bf16.msra.mxu0 0
    %730 = vmatpush.bf16.msra.mxu0 0
    %731 = vmatpush.bf16.msra.mxu0 %v718
    %732 = vmatmul.bf16.gmra.mxu0 %v720
    %v733 = vpop.f32.mrf.mxu0
    %v734 = vadd.f32 %v706, %v733
    %v735 = vpop.f32.mrf.mxu0
    %v736 = vadd.f32 %v708, %v735
    %737 = vmatmul.bf16.gmra.mxu0 %v722
    %v738 = vpop.f32.mrf.mxu0
    %v739 = vadd.f32 %v711, %v738
    %v740 = vpop.f32.mrf.mxu0
    %741 = vdwg.mxu0
    %s742 = scalar_lea.vmem [#allocation7], 16
    %v743 = vld [vmem:[%s742] sm:$0xf]
    %v744 = vld [vmem:[%s742 + $0x4] sm:$0xf]
    %v745 = vrot.slane %v667, 1
    %v746 = vrot.slane %v668, 1
    %v747 = vsel %vm222, %v745, %v746
    %v750 = vunpack.c.l.b16 %v743
    %v751 = vunpack.c.l.b16 %v744
    %v752 = vpack.c.b16 %v751, %v750
    %v755 = vsel %vm334, %v747, 0
    %v758 = vsel %vm334, %v746, 0
    %760 = vmatpush.bf16.msra.mxu0 0
    %761 = vmatpush.bf16.msra.mxu0 0
    %762 = vmatpush.bf16.msra.mxu0 0
    %763 = vmatpush.bf16.msra.mxu0 0
    %764 = vmatpush.bf16.msra.mxu0 0
    %765 = vmatpush.bf16.msra.mxu0 0
    %766 = vmatpush.bf16.msra.mxu0 0
    %767 = vmatpush.bf16.msra.mxu0 %v752
    %768 = vmatmul.bf16.gmra.mxu0 %v755
    %v769 = vpop.f32.mrf.mxu0
    %v770 = vadd.f32 0.0, %v769
    %v771 = vpop.f32.mrf.mxu0
    %v772 = vadd.f32 0.0, %v771
    %773 = vmatmul.bf16.gmra.mxu0 %v758
    %v774 = vpop.f32.mrf.mxu0
    %v775 = vadd.f32 0.0, %v774
    %v776 = vpop.f32.mrf.mxu0
    %777 = vdwg.mxu0
    %v778 = vadd.f32 %v734, %v770
    %v779 = vadd.f32 %v736, %v772
    %v780 = vadd.f32 %v739, %v775
    %s781 = scalar_lea.vmem [#allocation7], 24
    %v782 = vld [vmem:[%s781] sm:$0xf]
    %v783 = vld [vmem:[%s781 + $0x4] sm:$0xf]
    %vm784 = vsmask.f32 6400
    %v785 = vrot.slane %v670, 1
    %v786 = vrot.slane %v672, 2
    %v787 = vor.u32 %v785, %v786
    %v788 = vrot.slane %v681, 1
    %v789 = vrot.slane %v677, 2
    %v790 = vor.u32 %v788, %v789
    %v791 = vsel %vm784, %v787, %v790
    %v794 = vunpack.c.l.b16 %v782
    %v795 = vunpack.c.l.b16 %v783
    %v796 = vpack.c.b16 %v795, %v794
    %v799 = vsel %vm334, %v791, 0
    %v802 = vsel %vm334, %v790, 0
    %804 = vmatpush.bf16.msra.mxu0 0
    %805 = vmatpush.bf16.msra.mxu0 0
    %806 = vmatpush.bf16.msra.mxu0 0
    %807 = vmatpush.bf16.msra.mxu0 0
    %808 = vmatpush.bf16.msra.mxu0 0
    %809 = vmatpush.bf16.msra.mxu0 0
    %810 = vmatpush.bf16.msra.mxu0 0
    %811 = vmatpush.bf16.msra.mxu0 %v796
    %812 = vmatmul.bf16.gmra.mxu0 %v799
    %v813 = vpop.f32.mrf.mxu0
    %v814 = vadd.f32 0.0, %v813
    %v815 = vpop.f32.mrf.mxu0
    %v816 = vadd.f32 0.0, %v815
    %817 = vmatmul.bf16.gmra.mxu0 %v802
    %v818 = vpop.f32.mrf.mxu0
    %v819 = vadd.f32 0.0, %v818
    %v820 = vpop.f32.mrf.mxu0
    %821 = vdwg.mxu0
    %v822 = vadd.f32 %v778, %v814
    %v823 = vadd.f32 %v779, %v816
    %v824 = vadd.f32 %v780, %v819
    %s825 = scalar_lea.vmem [#allocation7], 32
    %v826 = vld [vmem:[%s825] sm:$0xf]
    %v827 = vld [vmem:[%s825 + $0x4] sm:$0xf]
    %v829 = vunpack.c.l.b16 %v654
    %v830 = vpack.c.b16 %v829, %v666
    %vm831 = vcmask 1045504
    %v832 = vrot.slane %v667, 2
    %v833 = vrot.slane %v830, 2
    %v834 = vsel %vm831, %v832, %v833
    %v837 = vunpack.c.l.b16 %v826
    %v838 = vunpack.c.l.b16 %v827
    %v839 = vpack.c.b16 %v838, %v837
    %v842 = vsel %vm334, %v834, 0
    %v845 = vsel %vm334, %v833, 0
    %847 = vmatpush.bf16.msra.mxu0 0
    %848 = vmatpush.bf16.msra.mxu0 0
    %849 = vmatpush.bf16.msra.mxu0 0
    %850 = vmatpush.bf16.msra.mxu0 0
    %851 = vmatpush.bf16.msra.mxu0 0
    %852 = vmatpush.bf16.msra.mxu0 0
    %853 = vmatpush.bf16.msra.mxu0 0
    %854 = vmatpush.bf16.msra.mxu0 %v839
    %855 = vmatmul.bf16.gmra.mxu0 %v842
    %v856 = vpop.f32.mrf.mxu0
    %v857 = vadd.f32 0.0, %v856
    %v858 = vpop.f32.mrf.mxu0
    %v859 = vadd.f32 0.0, %v858
    %860 = vmatmul.bf16.gmra.mxu0 %v845
    %v861 = vpop.f32.mrf.mxu0
    %v862 = vadd.f32 0.0, %v861
    %v863 = vpop.f32.mrf.mxu0
    %864 = vdwg.mxu0
    %v865 = vadd.f32 %v822, %v857
    %v866 = vadd.f32 %v823, %v859
    %v867 = vadd.f32 %v824, %v862
    %s868 = scalar_lea.vmem [#allocation7], 40
    %v869 = vld [vmem:[%s868] sm:$0xf]
    %v870 = vld [vmem:[%s868 + $0x4] sm:$0xf]
    %vm871 = vsmask.f32 5376
    %v872 = vrot.slane %v670, 2
    %v873 = vrot.slane %v672, 3
    %v874 = vor.u32 %v872, %v873
    %v876 = vshrl.u32 %v830, 16
    %v878 = vrot.slane %v876, 2
    %v879 = vshll.u32 %v830, 16
    %v881 = vrot.slane %v879, 3
    %v882 = vor.u32 %v878, %v881
    %v883 = vsel %vm871, %v874, %v882
    %v886 = vunpack.c.l.b16 %v869
    %v887 = vunpack.c.l.b16 %v870
    %v888 = vpack.c.b16 %v887, %v886
    %v891 = vsel %vm334, %v883, 0
    %v894 = vsel %vm334, %v882, 0
    %896 = vmatpush.bf16.msra.mxu0 0
    %897 = vmatpush.bf16.msra.mxu0 0
    %898 = vmatpush.bf16.msra.mxu0 0
    %899 = vmatpush.bf16.msra.mxu0 0
    %900 = vmatpush.bf16.msra.mxu0 0
    %901 = vmatpush.bf16.msra.mxu0 0
    %902 = vmatpush.bf16.msra.mxu0 0
    %903 = vmatpush.bf16.msra.mxu0 %v888
    %904 = vmatmul.bf16.gmra.mxu0 %v891
    %v905 = vpop.f32.mrf.mxu0
    %v906 = vadd.f32 0.0, %v905
    %v907 = vpop.f32.mrf.mxu0
    %v908 = vadd.f32 0.0, %v907
    %909 = vmatmul.bf16.gmra.mxu0 %v894
    %v910 = vpop.f32.mrf.mxu0
    %v911 = vadd.f32 0.0, %v910
    %v912 = vpop.f32.mrf.mxu0
    %913 = vdwg.mxu0
    %v914 = vadd.f32 %v865, %v906
    %v915 = vadd.f32 %v866, %v908
    %v916 = vadd.f32 %v867, %v911
    %s917 = scalar_lea.vmem [#allocation7], 48
    %v918 = vld [vmem:[%s917] sm:$0xf]
    %v919 = vld [vmem:[%s917 + $0x4] sm:$0xf]
    %vm920 = vcmask 1044480
    %v921 = vrot.slane %v667, 3
    %v922 = vrot.slane %v830, 3
    %v923 = vsel %vm920, %v921, %v922
    %v926 = vunpack.c.l.b16 %v918
    %v927 = vunpack.c.l.b16 %v919
    %v928 = vpack.c.b16 %v927, %v926
    %v931 = vsel %vm334, %v923, 0
    %v934 = vsel %vm334, %v922, 0
    %936 = vmatpush.bf16.msra.mxu0 0
    %937 = vmatpush.bf16.msra.mxu0 0
    %938 = vmatpush.bf16.msra.mxu0 0
    %939 = vmatpush.bf16.msra.mxu0 0
    %940 = vmatpush.bf16.msra.mxu0 0
    %941 = vmatpush.bf16.msra.mxu0 0
    %942 = vmatpush.bf16.msra.mxu0 0
    %943 = vmatpush.bf16.msra.mxu0 %v928
    %944 = vmatmul.bf16.gmra.mxu0 %v931
    %v945 = vpop.f32.mrf.mxu0
    %v946 = vadd.f32 0.0, %v945
    %v947 = vpop.f32.mrf.mxu0
    %v948 = vadd.f32 0.0, %v947
    %949 = vmatmul.bf16.gmra.mxu0 %v934
    %v950 = vpop.f32.mrf.mxu0
    %v951 = vadd.f32 0.0, %v950
    %v952 = vpop.f32.mrf.mxu0
    %953 = vdwg.mxu0
    %v954 = vadd.f32 %v914, %v946
    %v955 = vadd.f32 %v915, %v948
    %v956 = vadd.f32 %v916, %v951
    %s957 = scalar_lea.vmem [#allocation7], 56
    %v958 = vld [vmem:[%s957] sm:$0xf]
    %v959 = vld [vmem:[%s957 + $0x4] sm:$0xf]
    %vm960 = vsmask.f32 4352
    %v961 = vrot.slane %v670, 3
    %v962 = vrot.slane %v672, 4
    %v963 = vor.u32 %v961, %v962
    %v964 = vrot.slane %v876, 3
    %v965 = vrot.slane %v879, 4
    %v966 = vor.u32 %v964, %v965
    %v967 = vsel %vm960, %v963, %v966
    %v970 = vunpack.c.l.b16 %v958
    %v971 = vunpack.c.l.b16 %v959
    %v972 = vpack.c.b16 %v971, %v970
    %v975 = vsel %vm334, %v967, 0
    %v978 = vsel %vm334, %v966, 0
    %980 = vmatpush.bf16.msra.mxu0 0
    %981 = vmatpush.bf16.msra.mxu0 0
    %982 = vmatpush.bf16.msra.mxu0 0
    %983 = vmatpush.bf16.msra.mxu0 0
    %984 = vmatpush.bf16.msra.mxu0 0
    %985 = vmatpush.bf16.msra.mxu0 0
    %986 = vmatpush.bf16.msra.mxu0 0
    %987 = vmatpush.bf16.msra.mxu0 %v972
    %988 = vmatmul.bf16.gmra.mxu0 %v975
    %v989 = vpop.f32.mrf.mxu0
    %v990 = vadd.f32 0.0, %v989
    %v991 = vpop.f32.mrf.mxu0
    %v992 = vadd.f32 0.0, %v991
    %993 = vmatmul.bf16.gmra.mxu0 %v978
    %v994 = vpop.f32.mrf.mxu0
    %v995 = vadd.f32 0.0, %v994
    %v996 = vpop.f32.mrf.mxu0
    %997 = vdwg.mxu0
    %v998 = vadd.f32 %v954, %v990
    %v999 = vadd.f32 %v955, %v992
    %v1000 = vadd.f32 %v956, %v995
    %s1001 = scalar_lea.vmem [#allocation7], 64
    %v1002 = vld [vmem:[%s1001] sm:$0xf]
    %v1003 = vld [vmem:[%s1001 + $0x4] sm:$0xf]
    %v1004 = vpack.c.b16 %v666, %v665
    %v1005 = vpack.c.b16 %v829, %v829
    %v1008 = vunpack.c.l.b16 %v1002
    %v1009 = vunpack.c.l.b16 %v1003
    %v1010 = vpack.c.b16 %v1009, %v1008
    %v1013 = vsel %vm334, %v1004, 0
    %v1016 = vsel %vm334, %v1005, 0
    %1018 = vmatpush.bf16.msra.mxu0 0
    %1019 = vmatpush.bf16.msra.mxu0 0
    %1020 = vmatpush.bf16.msra.mxu0 0
    %1021 = vmatpush.bf16.msra.mxu0 0
    %1022 = vmatpush.bf16.msra.mxu0 0
    %1023 = vmatpush.bf16.msra.mxu0 0
    %1024 = vmatpush.bf16.msra.mxu0 0
    %1025 = vmatpush.bf16.msra.mxu0 %v1010
    %1026 = vmatmul.bf16.gmra.mxu0 %v1013
    %v1027 = vpop.f32.mrf.mxu0
    %v1028 = vadd.f32 0.0, %v1027
    %v1029 = vpop.f32.mrf.mxu0
    %v1030 = vadd.f32 0.0, %v1029
    %1031 = vmatmul.bf16.gmra.mxu0 %v1016
    %v1032 = vpop.f32.mrf.mxu0
    %v1033 = vadd.f32 0.0, %v1032
    %v1034 = vpop.f32.mrf.mxu0
    %1035 = vdwg.mxu0
    %v1036 = vadd.f32 %v998, %v1028
    %v1037 = vadd.f32 %v999, %v1030
    %v1038 = vadd.f32 %v1000, %v1033
    %s1039 = scalar_lea.vmem [#allocation7], 72
    %v1040 = vld [vmem:[%s1039] sm:$0xf]
    %v1041 = vld [vmem:[%s1039 + $0x4] sm:$0xf]
    %v1042 = vshrl.u32 %v1004, 16
    %v1044 = vshll.u32 %v1004, 16
    %v1046 = vrot.slane %v1044, 1
    %v1047 = vor.u32 %v1042, %v1046
    %v1048 = vshll.u32 %v1005, 16
    %v1050 = vrot.slane %v1048, 1
    %v1051 = vsel %vm127, %v1047, %v1050
    %v1052 = vshrl.u32 %v1005, 16
    %v1054 = vor.u32 %v1052, %v1050
    %v1057 = vunpack.c.l.b16 %v1040
    %v1058 = vunpack.c.l.b16 %v1041
    %v1059 = vpack.c.b16 %v1058, %v1057
    %v1062 = vsel %vm334, %v1051, 0
    %v1065 = vsel %vm334, %v1054, 0
    %1067 = vmatpush.bf16.msra.mxu0 0
    %1068 = vmatpush.bf16.msra.mxu0 0
    %1069 = vmatpush.bf16.msra.mxu0 0
    %1070 = vmatpush.bf16.msra.mxu0 0
    %1071 = vmatpush.bf16.msra.mxu0 0
    %1072 = vmatpush.bf16.msra.mxu0 0
    %1073 = vmatpush.bf16.msra.mxu0 0
    %1074 = vmatpush.bf16.msra.mxu0 %v1059
    %1075 = vmatmul.bf16.gmra.mxu0 %v1062
    %v1076 = vpop.f32.mrf.mxu0
    %v1077 = vadd.f32 0.0, %v1076
    %v1078 = vpop.f32.mrf.mxu0
    %v1079 = vadd.f32 0.0, %v1078
    %1080 = vmatmul.bf16.gmra.mxu0 %v1065
    %v1081 = vpop.f32.mrf.mxu0
    %v1082 = vadd.f32 0.0, %v1081
    %v1083 = vpop.f32.mrf.mxu0
    %1084 = vdwg.mxu0
    %v1085 = vadd.f32 %v1036, %v1077
    %v1086 = vadd.f32 %v1037, %v1079
    %v1087 = vadd.f32 %v1038, %v1082
    %s1088 = scalar_lea.vmem [#allocation7], 80
    %v1089 = vld [vmem:[%s1088] sm:$0xf]
    %v1090 = vld [vmem:[%s1088 + $0x4] sm:$0xf]
    %v1091 = vrot.slane %v1004, 1
    %v1092 = vrot.slane %v1005, 1
    %v1093 = vsel %vm222, %v1091, %v1092
    %v1096 = vunpack.c.l.b16 %v1089
    %v1097 = vunpack.c.l.b16 %v1090
    %v1098 = vpack.c.b16 %v1097, %v1096
    %v1101 = vsel %vm334, %v1093, 0
    %v1104 = vsel %vm334, %v1092, 0
    %1106 = vmatpush.bf16.msra.mxu0 0
    %1107 = vmatpush.bf16.msra.mxu0 0
    %1108 = vmatpush.bf16.msra.mxu0 0
    %1109 = vmatpush.bf16.msra.mxu0 0
    %1110 = vmatpush.bf16.msra.mxu0 0
    %1111 = vmatpush.bf16.msra.mxu0 0
    %1112 = vmatpush.bf16.msra.mxu0 0
    %1113 = vmatpush.bf16.msra.mxu0 %v1098
    %1114 = vmatmul.bf16.gmra.mxu0 %v1101
    %v1115 = vpop.f32.mrf.mxu0
    %v1116 = vadd.f32 0.0, %v1115
    %v1117 = vpop.f32.mrf.mxu0
    %v1118 = vadd.f32 0.0, %v1117
    %1119 = vmatmul.bf16.gmra.mxu0 %v1104
    %v1120 = vpop.f32.mrf.mxu0
    %v1121 = vadd.f32 0.0, %v1120
    %v1122 = vpop.f32.mrf.mxu0
    %1123 = vdwg.mxu0
    %v1124 = vadd.f32 %v1085, %v1116
    %v1125 = vadd.f32 %v1086, %v1118
    %v1126 = vadd.f32 %v1087, %v1121
    %s1127 = scalar_lea.vmem [#allocation7], 88
    %v1128 = vld [vmem:[%s1127] sm:$0xf]
    %v1129 = vld [vmem:[%s1127 + $0x4] sm:$0xf]
    %v1130 = vrot.slane %v1042, 1
    %v1131 = vrot.slane %v1044, 2
    %v1132 = vor.u32 %v1130, %v1131
    %v1133 = vrot.slane %v1052, 1
    %v1134 = vrot.slane %v1048, 2
    %v1135 = vor.u32 %v1133, %v1134
    %v1136 = vsel %vm784, %v1132, %v1135
    %v1139 = vunpack.c.l.b16 %v1128
    %v1140 = vunpack.c.l.b16 %v1129
    %v1141 = vpack.c.b16 %v1140, %v1139
    %v1144 = vsel %vm334, %v1136, 0
    %v1147 = vsel %vm334, %v1135, 0
    %1149 = vmatpush.bf16.msra.mxu0 0
    %1150 = vmatpush.bf16.msra.mxu0 0
    %1151 = vmatpush.bf16.msra.mxu0 0
    %1152 = vmatpush.bf16.msra.mxu0 0
    %1153 = vmatpush.bf16.msra.mxu0 0
    %1154 = vmatpush.bf16.msra.mxu0 0
    %1155 = vmatpush.bf16.msra.mxu0 0
    %1156 = vmatpush.bf16.msra.mxu0 %v1141
    %1157 = vmatmul.bf16.gmra.mxu0 %v1144
    %v1158 = vpop.f32.mrf.mxu0
    %v1159 = vadd.f32 0.0, %v1158
    %v1160 = vpop.f32.mrf.mxu0
    %v1161 = vadd.f32 0.0, %v1160
    %1162 = vmatmul.bf16.gmra.mxu0 %v1147
    %v1163 = vpop.f32.mrf.mxu0
    %v1164 = vadd.f32 0.0, %v1163
    %v1165 = vpop.f32.mrf.mxu0
    %1166 = vdwg.mxu0
    %v1167 = vadd.f32 %v1124, %v1159
    %v1168 = vadd.f32 %v1125, %v1161
    %v1169 = vadd.f32 %v1126, %v1164
    %s1170 = scalar_lea.vmem [#allocation7], 96
    %v1171 = vld [vmem:[%s1170] sm:$0xf]
    %v1172 = vld [vmem:[%s1170 + $0x4] sm:$0xf]
    %v1174 = vunpack.c.l.b16 %v655
    %v1175 = vpack.c.b16 %v1174, %v829
    %v1176 = vrot.slane %v1004, 2
    %v1177 = vrot.slane %v1175, 2
    %v1178 = vsel %vm831, %v1176, %v1177
    %v1181 = vunpack.c.l.b16 %v1171
    %v1182 = vunpack.c.l.b16 %v1172
    %v1183 = vpack.c.b16 %v1182, %v1181
    %v1186 = vsel %vm334, %v1178, 0
    %v1189 = vsel %vm334, %v1177, 0
    %1191 = vmatpush.bf16.msra.mxu0 0
    %1192 = vmatpush.bf16.msra.mxu0 0
    %1193 = vmatpush.bf16.msra.mxu0 0
    %1194 = vmatpush.bf16.msra.mxu0 0
    %1195 = vmatpush.bf16.msra.mxu0 0
    %1196 = vmatpush.bf16.msra.mxu0 0
    %1197 = vmatpush.bf16.msra.mxu0 0
    %1198 = vmatpush.bf16.msra.mxu0 %v1183
    %1199 = vmatmul.bf16.gmra.mxu0 %v1186
    %v1200 = vpop.f32.mrf.mxu0
    %v1201 = vadd.f32 0.0, %v1200
    %v1202 = vpop.f32.mrf.mxu0
    %v1203 = vadd.f32 0.0, %v1202
    %1204 = vmatmul.bf16.gmra.mxu0 %v1189
    %v1205 = vpop.f32.mrf.mxu0
    %v1206 = vadd.f32 0.0, %v1205
    %v1207 = vpop.f32.mrf.mxu0
    %1208 = vdwg.mxu0
    %v1209 = vadd.f32 %v1167, %v1201
    %v1210 = vadd.f32 %v1168, %v1203
    %v1211 = vadd.f32 %v1169, %v1206
    %s1212 = scalar_lea.vmem [#allocation7], 104
    %v1213 = vld [vmem:[%s1212] sm:$0xf]
    %v1214 = vld [vmem:[%s1212 + $0x4] sm:$0xf]
    %v1215 = vrot.slane %v1042, 2
    %v1216 = vrot.slane %v1044, 3
    %v1217 = vor.u32 %v1215, %v1216
    %v1219 = vshrl.u32 %v1175, 16
    %v1221 = vrot.slane %v1219, 2
    %v1222 = vshll.u32 %v1175, 16
    %v1224 = vrot.slane %v1222, 3
    %v1225 = vor.u32 %v1221, %v1224
    %v1226 = vsel %vm871, %v1217, %v1225
    %v1229 = vunpack.c.l.b16 %v1213
    %v1230 = vunpack.c.l.b16 %v1214
    %v1231 = vpack.c.b16 %v1230, %v1229
    %v1234 = vsel %vm334, %v1226, 0
    %v1237 = vsel %vm334, %v1225, 0
    %1239 = vmatpush.bf16.msra.mxu0 0
    %1240 = vmatpush.bf16.msra.mxu0 0
    %1241 = vmatpush.bf16.msra.mxu0 0
    %1242 = vmatpush.bf16.msra.mxu0 0
    %1243 = vmatpush.bf16.msra.mxu0 0
    %1244 = vmatpush.bf16.msra.mxu0 0
    %1245 = vmatpush.bf16.msra.mxu0 0
    %1246 = vmatpush.bf16.msra.mxu0 %v1231
    %1247 = vmatmul.bf16.gmra.mxu0 %v1234
    %v1248 = vpop.f32.mrf.mxu0
    %v1249 = vadd.f32 0.0, %v1248
    %v1250 = vpop.f32.mrf.mxu0
    %v1251 = vadd.f32 0.0, %v1250
    %1252 = vmatmul.bf16.gmra.mxu0 %v1237
    %v1253 = vpop.f32.mrf.mxu0
    %v1254 = vadd.f32 0.0, %v1253
    %v1255 = vpop.f32.mrf.mxu0
    %1256 = vdwg.mxu0
    %v1257 = vadd.f32 %v1209, %v1249
    %v1258 = vadd.f32 %v1210, %v1251
    %v1259 = vadd.f32 %v1211, %v1254
    %v1260 = vld [vmem:[%s8] sm:$0x1]
    %v1262 = vperm.slane %v1260, 0
    %v1264 = vadd.f32 %v1257, %v1262
    %v1265 = vadd.f32 %v1258, %v1262
    %v1266 = vadd.f32 %v1259, %v1262
    %v1267 = vmax.f32 %v1264, 0.0
    %v1268 = vmax.f32 %v1265, 0.0
    %v1269 = vmax.f32 %v1266, 0.0
    %v1270 = vpack.c.bf16 %v1268, %v1267
    %v1271 = vpack.c.bf16 %v1269, %v1269
    %v1272 = vld [vmem:[%s11] sm:$0x1]
    %vm1273 = vcmask 171008
    %v1275 = vsel %vm1273, %v1272, 0
    %vm1277 = vcmask 1041408
    %vm1278 = vcmask 1042432
    %v1279 = vsel %vm1277, 4294967295, 65535
    %v1280 = vsel %vm1278, %v1279, 0
    %v1282 = vand.u32 %v1271, %v1280
    %1284 = vmatpush.bf16.msra.mxu0 0
    %1285 = vmatpush.bf16.msra.mxu0 0
    %1286 = vmatpush.bf16.msra.mxu0 0
    %1287 = vmatpush.bf16.msra.mxu0 0
    %1288 = vmatpush.bf16.msra.mxu0 0
    %1289 = vmatpush.bf16.msra.mxu0 0
    %1290 = vmatpush.bf16.msra.mxu0 %v1282
    %1291 = vmatpush.bf16.msra.mxu0 %v1270
    %1292 = vmatmul.bf16.gmra.mxu0 %v1275
    %v1293 = vpop.f32.mrf.mxu0
    %v1294 = vadd.f32 0.0, %v1293
    %v1295 = vpop.f32.mrf.mxu0
    %1296 = vdwg.mxu0
    %v1297 = vpack.c.bf16 %v1294, %v1294
    %v1298 = vld [vmem:[#allocation8] sm:$0xf]
    %v1299 = vld [vmem:[#allocation8 + $0x4] sm:$0xf]
    %v1300 = vld [vmem:[#allocation8 + $0x8] sm:$0xf]
    %v1301 = vld [vmem:[#allocation8 + $0xc] sm:$0xf]
    %v1302 = vld [vmem:[#allocation8 + $0x10] sm:$0xf]
    %v1303 = vld [vmem:[#allocation8 + $0x14] sm:$0xf]
    %v1304 = vld [vmem:[#allocation8 + $0x18] sm:$0xf]
    %v1305 = vld [vmem:[#allocation8 + $0x1c] sm:$0xf]
    %v1306 = vld [vmem:[#allocation8 + $0x20] sm:$0xf]
    %v1307 = vld [vmem:[#allocation8 + $0x24] sm:$0xf]
    %v1308 = vld [vmem:[#allocation8 + $0x28] sm:$0xf]
    %v1309 = vld [vmem:[#allocation8 + $0x2c] sm:$0xf]
    %v1310 = vld [vmem:[#allocation8 + $0x30] sm:$0xf]
    %v1311 = vld [vmem:[#allocation8 + $0x34] sm:$0xf]
    %v1312 = vld [vmem:[#allocation8 + $0x38] sm:$0xf]
    %v1313 = vld [vmem:[#allocation8 + $0x3c] sm:$0xf]
    %v1314 = vld [vmem:[%s10] sm:$0x1]
    %v1316 = vperm.slane %v1314, 0
    %v1334 = vunpack.c.l.b16 %v1298
    %v1335 = vunpack.c.l.b16 %v1299
    %v1336 = vunpack.c.l.b16 %v1300
    %v1337 = vunpack.c.l.b16 %v1301
    %v1338 = vunpack.c.l.b16 %v1302
    %v1339 = vunpack.c.l.b16 %v1303
    %v1340 = vunpack.c.l.b16 %v1304
    %v1341 = vunpack.c.l.b16 %v1305
    %v1342 = vunpack.c.l.b16 %v1306
    %v1343 = vunpack.c.l.b16 %v1307
    %v1344 = vunpack.c.l.b16 %v1308
    %v1345 = vunpack.c.l.b16 %v1309
    %v1346 = vunpack.c.l.b16 %v1310
    %v1347 = vunpack.c.l.b16 %v1311
    %v1348 = vunpack.c.l.b16 %v1312
    %v1349 = vunpack.c.l.b16 %v1313
    %v1350 = vpack.c.b16 %v1335, %v1334
    %v1351 = vpack.c.b16 %v1337, %v1336
    %v1352 = vpack.c.b16 %v1339, %v1338
    %v1353 = vpack.c.b16 %v1341, %v1340
    %v1354 = vpack.c.b16 %v1343, %v1342
    %v1355 = vpack.c.b16 %v1345, %v1344
    %v1356 = vpack.c.b16 %v1347, %v1346
    %v1357 = vpack.c.b16 %v1349, %v1348
    %1366 = vmatpush.bf16.msra.mxu0 %v1357
    %1367 = vmatpush.bf16.msra.mxu0 %v1356
    %1368 = vmatpush.bf16.msra.mxu0 %v1355
    %1369 = vmatpush.bf16.msra.mxu0 %v1354
    %1370 = vmatpush.bf16.msra.mxu0 %v1353
    %1371 = vmatpush.bf16.msra.mxu0 %v1352
    %1372 = vmatpush.bf16.msra.mxu0 %v1351
    %1373 = vmatpush.bf16.msra.mxu0 %v1350
    %1374 = vmatmul.bf16.gmra.mxu0 %v1297
    %v1375 = vpop.f32.mrf.mxu0
    %v1376 = vadd.f32 %v1316, %v1375
    %v1377 = vpop.f32.mrf.mxu0
    %1378 = vdwg.mxu0
    %1379 = vst [vmem:[#allocation10] sm:$0x3] %v1376
    // Predicated region
    $region66: #{tpu_custom_call.1} parent=1 // pred_check
      _
    $region67: #{tpu_custom_call.1} parent=1 // pred_check_branch
      %1381 = sbr.rel (0) target = $region69
    $region68: #{tpu_custom_call.1} parent=1 // pred_region
      %1383 = vsyncadd [#allocation4], 0
      %s1385 = sshll.u32 [#allocation10], 4
      %s1386 = int_to_ptr.vmem [resolvable:$true] %s1385
      %s1387 = sshll.u32 %s12, 4
      %s1388 = int_to_ptr.hbm [resolvable:$true] %s1387
      %1390 = dma.vmem_to_hbm [thread:$0]  %s1386, 32, %s1388, [#allocation4]
    $region69: #{tpu_custom_call.1} parent=1 // pred_fallthru
      _
    // Predicated region
    $region70: #{tpu_custom_call.1} parent=1 // pred_check
      _
    $region71: #{tpu_custom_call.1} parent=1 // pred_check_branch
      %1392 = sbr.rel (0) target = $region73
    $region72: #{tpu_custom_call.1} parent=1 // pred_region
      %1394 = dma.done [#allocation4], 32
    $region73: #{tpu_custom_call.1} parent=1 // pred_fallthru
      _
    %1395 = vsyncpa [#allocation3], 1
    %1396 = vsyncpa [#allocation6], 1
    %1397 = vsyncpa [#allocation9], 1
    %1398 = vsyncpa [#allocation4], 1

</llo_original>
